<compile_context>
chip_gen: v5e
topology: v5e:2x2
jax: 0.10.0
libtpu: 0.0.40
codegen_flags: <defaults>
</compile_context>

<pallas_src>
import functools

import jax
import jax.numpy as jnp
from jax import lax
from jax.experimental import pallas as pl
from jax.experimental.pallas import tpu as pltpu

# Switch to jnp.bfloat16 on v6e/v7x for ~2x MXU rate and half the weight/patch
# bytes (loosen the allclose tolerance accordingly).  f32 keeps the 1e-4 check.
_MATMUL_DTYPE = jnp.float32

# 3x3 tap offsets, (dy, dx)-major order == weight reshape order in the wrapper.
_TAPS = tuple((ky, kx) for ky in (-1, 0, 1) for kx in (-1, 0, 1))


# ----------------------------- Pallas kernel -------------------------------

def _basic_block_kernel(x_ref, w1_ref, w2_ref, bias_ref, o_ref,
                        xbuf, pbuf, *, H, W, pad):
    """Fused conv3x3+BN+ReLU -> conv3x3+BN+add+ReLU on one (C, H*W) image."""
    C = x_ref.shape[1]
    HW = H * W

    # Column-within-row index, used for the horizontal validity mask.
    pw = lax.broadcasted_iota(jnp.int32, (1, HW), 1) % W

    # Zero the haloed activation buffer once per grid step (halos stay zero;
    # the interior is overwritten by each im2col below).
    xbuf[...] = jnp.zeros(xbuf.shape, xbuf.dtype)

    def im2col(act):
        # act: (C, HW).  Fills pbuf with SAME-padded 3x3 patches, rows ordered
        # (tap, channel) with tap = dy*3 + dx; returns the (9*C, HW) matrix.
        xbuf[:, pad:pad + HW] = act                        # lane-aligned store
        for t, (ky, kx) in enumerate(_TAPS):
            off = ky * W + kx
            piece = xbuf[:, pad + off:pad + off + HW]      # shifted tap load
            # Vertically out-of-range rows land in the zero halo; only the
            # horizontal wrap (w + kx outside [0, W)) still needs masking.
            valid = (pw + kx >= 0) & (pw + kx < W)
            pbuf[t * C:(t + 1) * C, :] = jnp.where(valid, piece, 0)
        return pbuf[...]

    x_in = x_ref[0]                                  # (C, HW)
    x_res = x_in.astype(jnp.float32)                 # residual kept in f32
    b1 = bias_ref[:, 0:1].astype(jnp.float32)        # (C, 1) lane-broadcast
    b2 = bias_ref[:, 1:2].astype(jnp.float32)

    # conv1 (+ folded BN1) + ReLU : single MXU matmul with K = 9*C.
    p1 = im2col(x_in.astype(xbuf.dtype))
    y1 = jnp.dot(w1_ref[...], p1, preferred_element_type=jnp.float32)
    mid = jnp.maximum(y1 + b1, 0.0)                  # (C, HW), stays in VMEM

    # conv2 (+ folded BN2) + residual + ReLU.
    p2 = im2col(mid.astype(xbuf.dtype))
    y2 = jnp.dot(w2_ref[...], p2, preferred_element_type=jnp.float32)
    out = jnp.maximum(y2 + b2 + x_res, 0.0)

    o_ref[0] = out.astype(o_ref.dtype)               # lane-dense (C, HW) store


# ------------------------------- wrapper ------------------------------------

def _fold_bn(gamma, beta, running_mean, running_var, eps=1e-5):
    scale = gamma / jnp.sqrt(running_var + eps)
    bias = beta - running_mean * scale
    return scale, bias


def basic_block_forward(x_nchw, params):
    """BasicBlock(inplanes=planes, stride=1, downsample=None), eval-mode BN."""
    # TODO(synk): stride>1 / downsample BasicBlock variants are not implemented.
    N, C, H, W = x_nchw.shape
    HW = H * W
    pad = ((W + 1 + 127) // 128) * 128               # lane-aligned halo >= W+1

    s1, b1 = _fold_bn(*params["bn1"])
    s2, b2 = _fold_bn(*params["bn2"])

    def to_mat(w_hwio, scale):                       # HWIO -> (Cout, 9*Cin), BN-scaled
        w = w_hwio * scale                           # scale broadcasts over Cout
        return jnp.transpose(w, (3, 0, 1, 2)).reshape(C, 9 * C).astype(_MATMUL_DTYPE)

    w1 = to_mat(params["w1"], s1)
    w2 = to_mat(params["w2"], s2)
    bias = jnp.stack([b1, b2], axis=1).astype(jnp.float32)   # (C, 2): one DMA

    x_flat = x_nchw.reshape(N, C, HW)                # free reshape; lanes = H*W

    kernel = functools.partial(_basic_block_kernel, H=H, W=W, pad=pad)
    out = pl.pallas_call(
        kernel,
        out_shape=jax.ShapeDtypeStruct((N, C, HW), x_nchw.dtype),
        grid=(N,),
        in_specs=[
            pl.BlockSpec((1, C, HW), lambda n: (n, 0, 0)),
            pl.BlockSpec((C, 9 * C), lambda n: (0, 0)),
            pl.BlockSpec((C, 9 * C), lambda n: (0, 0)),
            pl.BlockSpec((C, 2), lambda n: (0, 0)),
        ],
        out_specs=pl.BlockSpec((1, C, HW), lambda n: (n, 0, 0)),
        scratch_shapes=[
            pltpu.VMEM((C, pad + HW + pad), _MATMUL_DTYPE),  # zero-haloed act
            pltpu.VMEM((9 * C, HW), _MATMUL_DTYPE),          # im2col patches
        ],
        compiler_params=pltpu.CompilerParams(
            dimension_semantics=("parallel",)),
        # TODO(synk): for large H*W, tile the grid over rows (2-px halo) so the
        # per-step blocks fit v7x's smaller VMEM and feed both TensorCores.
    )(x_flat, w1, w2, bias)

    return out.reshape(N, C, H, W)


# ------------------------------ reference ----------------------------------

def _reference_forward(x_nchw, params):
    x = jnp.transpose(x_nchw, (0, 2, 3, 1)).astype(jnp.float32)
    dn = ("NHWC", "HWIO", "NHWC")

    def conv_bn(inp, w, bn):
        y = lax.conv_general_dilated(inp, w.astype(jnp.float32),
                                     window_strides=(1, 1), padding="SAME",
                                     dimension_numbers=dn)
        s, b = _fold_bn(*bn)
        return y * s + b

    out = jax.nn.relu(conv_bn(x, params["w1"], params["bn1"]))
    out = conv_bn(out, params["w2"], params["bn2"]) + x
    out = jax.nn.relu(out)
    return jnp.transpose(out, (0, 3, 1, 2))


# --------------------------------- main -------------------------------------

if __name__ == "__main__":
    N, C, H, W = 2, 8, 16, 16            # inplanes == planes (downsample=None)
    key = jax.random.PRNGKey(0)
    k = iter(jax.random.split(key, 12))

    x = jax.random.normal(next(k), (N, C, H, W), jnp.float32)

    # conv weights in HWIO layout (3, 3, Cin, Cout), no bias (conv3x3)
    w1 = jax.random.normal(next(k), (3, 3, C, C), jnp.float32) * 0.1
    w2 = jax.random.normal(next(k), (3, 3, C, C), jnp.float32) * 0.1

    # eval-mode BatchNorm params: (gamma, beta, running_mean, running_var)
    bn1 = (jax.random.uniform(next(k), (C,), jnp.float32, 0.5, 1.5),
           jax.random.normal(next(k), (C,), jnp.float32) * 0.1,
           jax.random.normal(next(k), (C,), jnp.float32) * 0.1,
           jax.random.uniform(next(k), (C,), jnp.float32, 0.5, 1.5))
    bn2 = (jax.random.uniform(next(k), (C,), jnp.float32, 0.5, 1.5),
           jax.random.normal(next(k), (C,), jnp.float32) * 0.1,
           jax.random.normal(next(k), (C,), jnp.float32) * 0.1,
           jax.random.uniform(next(k), (C,), jnp.float32, 0.5, 1.5))

    params = {"w1": w1, "bn1": bn1, "w2": w2, "bn2": bn2}

    out = jax.block_until_ready(basic_block_forward(x, params))
    ref = jax.block_until_ready(_reference_forward(x, params))

    assert out.shape == (N, C, H, W)
    assert jnp.allclose(out, ref, atol=1e-4, rtol=1e-4), "mismatch vs. reference"
    print("KERNEL_OK")
</pallas_src>

<mosaic_0001>
module attributes {stable_mosaic.version = 11 : i64} {
  func.func @_basic_block_kernel(%arg0: i32, %arg1: memref<1x8x256xf32, #tpu.memory_space<vmem>>, %arg2: memref<8x72xf32, #tpu.memory_space<vmem>>, %arg3: memref<8x72xf32, #tpu.memory_space<vmem>>, %arg4: memref<8x2xf32, #tpu.memory_space<vmem>>, %arg5: memref<1x8x256xf32, #tpu.memory_space<vmem>>, %arg6: memref<8x512xf32, #tpu.memory_space<vmem>>, %arg7: memref<72x256xf32, #tpu.memory_space<vmem>>) attributes {dimension_semantics = [#tpu.dimension_semantics<parallel>], iteration_bounds = array<i64: 2>, scalar_prefetch = 0 : i64, scratch_operands = 2 : i64, tpu.core_type = #tpu.core_type<tc>, window_params = [{transform_indices = @transform_0, window_bounds = array<i64: 1, 8, 256>}, {pipeline_mode = #tpu.pipeline_mode<synchronous>, transform_indices = @transform_1, window_bounds = array<i64: 8, 72>}, {pipeline_mode = #tpu.pipeline_mode<synchronous>, transform_indices = @transform_2, window_bounds = array<i64: 8, 72>}, {pipeline_mode = #tpu.pipeline_mode<synchronous>, transform_indices = @transform_3, window_bounds = array<i64: 8, 2>}, {transform_indices = @transform_4, window_bounds = array<i64: 1, 8, 256>}]} {
    %0 = tpu.iota {dimensions = array<i32: 1>} : vector<1x256xi32>
    %c16_i32 = arith.constant 16 : i32
    %c0_i32 = arith.constant 0 : i32
    %1 = arith.cmpi eq, %c16_i32, %c0_i32 : i32
    %c1_i32 = arith.constant 1 : i32
    %2 = arith.select %1, %c1_i32, %c16_i32 : i32
    %3 = vector.broadcast %2 : i32 to vector<1x256xi32>
    %4 = arith.remsi %0, %3 : vector<1x256xi32>
    %c0_i32_0 = arith.constant 0 : i32
    %5 = vector.broadcast %c0_i32_0 : i32 to vector<1x256xi32>
    %6 = arith.cmpi ne, %4, %5 : vector<1x256xi32>
    %c0_i32_1 = arith.constant 0 : i32
    %7 = vector.broadcast %c0_i32_1 : i32 to vector<1x256xi32>
    %8 = arith.cmpi slt, %4, %7 : vector<1x256xi32>
    %c0_i32_2 = arith.constant 0 : i32
    %9 = arith.cmpi slt, %2, %c0_i32_2 : i32
    %10 = vector.broadcast %9 : i1 to vector<1x256xi1>
    %11 = vector.broadcast %10 : vector<1x256xi1> to vector<1x256xi1>
    %12 = arith.xori %8, %11 : vector<1x256xi1>
    %13 = arith.andi %12, %6 : vector<1x256xi1>
    %14 = vector.broadcast %2 : i32 to vector<1x256xi32>
    %15 = arith.addi %4, %14 : vector<1x256xi32>
    %16 = arith.select %13, %15, %4 : vector<1x256xi1>, vector<1x256xi32>
    %cst = arith.constant 0.000000e+00 : f32
    %17 = vector.broadcast %cst : f32 to vector<8x512xf32>
    %c0 = arith.constant 0 : index
    %c0_3 = arith.constant 0 : index
    %18 = vector.load %arg6[%c0, %c0_3] : memref<8x512xf32, #tpu.memory_space<vmem>>, vector<8x512xf32>
    tpu.vector_store %arg6[%c0, %c0_3], %17 {strides = array<i32>} : memref<8x512xf32, #tpu.memory_space<vmem>>, vector<8x512xf32>,
    %c0_4 = arith.constant 0 : index
    %c0_5 = arith.constant 0 : index
    %c0_6 = arith.constant 0 : index
    %19 = vector.load %arg1[%c0_4, %c0_5, %c0_6] : memref<1x8x256xf32, #tpu.memory_space<vmem>>, vector<1x8x256xf32>
    %20 = vector.shape_cast %19 : vector<1x8x256xf32> to vector<8x256xf32>
    %c0_7 = arith.constant 0 : index
    %c0_8 = arith.constant 0 : index
    %21 = vector.load %arg4[%c0_7, %c0_8] : memref<8x2xf32, #tpu.memory_space<vmem>>, vector<8x1xf32>
    %c0_9 = arith.constant 0 : index
    %c1 = arith.constant 1 : index
    %22 = vector.load %arg4[%c0_9, %c1] : memref<8x2xf32, #tpu.memory_space<vmem>>, vector<8x1xf32>
    %c0_10 = arith.constant 0 : index
    %c128 = arith.constant 128 : index
    %23 = vector.load %arg6[%c0_10, %c128] : memref<8x512xf32, #tpu.memory_space<vmem>>, vector<8x256xf32>
    tpu.vector_store %arg6[%c0_10, %c128], %20 {strides = array<i32>} : memref<8x512xf32, #tpu.memory_space<vmem>>, vector<8x256xf32>,
    %c0_11 = arith.constant 0 : index
    %c111 = arith.constant 111 : index
    %24 = vector.load %arg6[%c0_11, %c111] : memref<8x512xf32, #tpu.memory_space<vmem>>, vector<8x256xf32>
    %c-1_i32 = arith.constant -1 : i32
    %25 = vector.broadcast %c-1_i32 : i32 to vector<1x256xi32>
    %26 = arith.addi %16, %25 : vector<1x256xi32>
    %c0_i32_12 = arith.constant 0 : i32
    %27 = vector.broadcast %c0_i32_12 : i32 to vector<1x256xi32>
    %28 = arith.cmpi sge, %26, %27 : vector<1x256xi32>
    %c-1_i32_13 = arith.constant -1 : i32
    %29 = vector.broadcast %c-1_i32_13 : i32 to vector<1x256xi32>
    %30 = arith.addi %16, %29 : vector<1x256xi32>
    %c16_i32_14 = arith.constant 16 : i32
    %31 = vector.broadcast %c16_i32_14 : i32 to vector<1x256xi32>
    %32 = arith.cmpi slt, %30, %31 : vector<1x256xi32>
    %33 = arith.andi %28, %32 : vector<1x256xi1>
    %c0_i32_15 = arith.constant 0 : i32
    %34 = arith.sitofp %c0_i32_15 : i32 to f32
    %35 = vector.shape_cast %33 : vector<1x256xi1> to vector<1x256xi1>
    %36 = vector.broadcast %35 : vector<1x256xi1> to vector<8x256xi1>
    %37 = vector.broadcast %34 : f32 to vector<8x256xf32>
    %38 = arith.select %36, %24, %37 : vector<8x256xi1>, vector<8x256xf32>
    %c0_16 = arith.constant 0 : index
    %c0_17 = arith.constant 0 : index
    %39 = vector.load %arg7[%c0_16, %c0_17] : memref<72x256xf32, #tpu.memory_space<vmem>>, vector<8x256xf32>
    tpu.vector_store %arg7[%c0_16, %c0_17], %38 {strides = array<i32>} : memref<72x256xf32, #tpu.memory_space<vmem>>, vector<8x256xf32>,
    %c0_18 = arith.constant 0 : index
    %c112 = arith.constant 112 : index
    %40 = vector.load %arg6[%c0_18, %c112] : memref<8x512xf32, #tpu.memory_space<vmem>>, vector<8x256xf32>
    %c0_i32_19 = arith.constant 0 : i32
    %41 = vector.broadcast %c0_i32_19 : i32 to vector<1x256xi32>
    %42 = arith.addi %16, %41 : vector<1x256xi32>
    %c0_i32_20 = arith.constant 0 : i32
    %43 = vector.broadcast %c0_i32_20 : i32 to vector<1x256xi32>
    %44 = arith.cmpi sge, %42, %43 : vector<1x256xi32>
    %c0_i32_21 = arith.constant 0 : i32
    %45 = vector.broadcast %c0_i32_21 : i32 to vector<1x256xi32>
    %46 = arith.addi %16, %45 : vector<1x256xi32>
    %c16_i32_22 = arith.constant 16 : i32
    %47 = vector.broadcast %c16_i32_22 : i32 to vector<1x256xi32>
    %48 = arith.cmpi slt, %46, %47 : vector<1x256xi32>
    %49 = arith.andi %44, %48 : vector<1x256xi1>
    %c0_i32_23 = arith.constant 0 : i32
    %50 = arith.sitofp %c0_i32_23 : i32 to f32
    %51 = vector.shape_cast %49 : vector<1x256xi1> to vector<1x256xi1>
    %52 = vector.broadcast %51 : vector<1x256xi1> to vector<8x256xi1>
    %53 = vector.broadcast %50 : f32 to vector<8x256xf32>
    %54 = arith.select %52, %40, %53 : vector<8x256xi1>, vector<8x256xf32>
    %c8 = arith.constant 8 : index
    %c0_24 = arith.constant 0 : index
    %55 = vector.load %arg7[%c8, %c0_24] : memref<72x256xf32, #tpu.memory_space<vmem>>, vector<8x256xf32>
    tpu.vector_store %arg7[%c8, %c0_24], %54 {strides = array<i32>} : memref<72x256xf32, #tpu.memory_space<vmem>>, vector<8x256xf32>,
    %c0_25 = arith.constant 0 : index
    %c113 = arith.constant 113 : index
    %56 = vector.load %arg6[%c0_25, %c113] : memref<8x512xf32, #tpu.memory_space<vmem>>, vector<8x256xf32>
    %c1_i32_26 = arith.constant 1 : i32
    %57 = vector.broadcast %c1_i32_26 : i32 to vector<1x256xi32>
    %58 = arith.addi %16, %57 : vector<1x256xi32>
    %c0_i32_27 = arith.constant 0 : i32
    %59 = vector.broadcast %c0_i32_27 : i32 to vector<1x256xi32>
    %60 = arith.cmpi sge, %58, %59 : vector<1x256xi32>
    %c1_i32_28 = arith.constant 1 : i32
    %61 = vector.broadcast %c1_i32_28 : i32 to vector<1x256xi32>
    %62 = arith.addi %16, %61 : vector<1x256xi32>
    %c16_i32_29 = arith.constant 16 : i32
    %63 = vector.broadcast %c16_i32_29 : i32 to vector<1x256xi32>
    %64 = arith.cmpi slt, %62, %63 : vector<1x256xi32>
    %65 = arith.andi %60, %64 : vector<1x256xi1>
    %c0_i32_30 = arith.constant 0 : i32
    %66 = arith.sitofp %c0_i32_30 : i32 to f32
    %67 = vector.shape_cast %65 : vector<1x256xi1> to vector<1x256xi1>
    %68 = vector.broadcast %67 : vector<1x256xi1> to vector<8x256xi1>
    %69 = vector.broadcast %66 : f32 to vector<8x256xf32>
    %70 = arith.select %68, %56, %69 : vector<8x256xi1>, vector<8x256xf32>
    %c16 = arith.constant 16 : index
    %c0_31 = arith.constant 0 : index
    %71 = vector.load %arg7[%c16, %c0_31] : memref<72x256xf32, #tpu.memory_space<vmem>>, vector<8x256xf32>
    tpu.vector_store %arg7[%c16, %c0_31], %70 {strides = array<i32>} : memref<72x256xf32, #tpu.memory_space<vmem>>, vector<8x256xf32>,
    %c0_32 = arith.constant 0 : index
    %c127 = arith.constant 127 : index
    %72 = vector.load %arg6[%c0_32, %c127] : memref<8x512xf32, #tpu.memory_space<vmem>>, vector<8x256xf32>
    %c-1_i32_33 = arith.constant -1 : i32
    %73 = vector.broadcast %c-1_i32_33 : i32 to vector<1x256xi32>
    %74 = arith.addi %16, %73 : vector<1x256xi32>
    %c0_i32_34 = arith.constant 0 : i32
    %75 = vector.broadcast %c0_i32_34 : i32 to vector<1x256xi32>
    %76 = arith.cmpi sge, %74, %75 : vector<1x256xi32>
    %c-1_i32_35 = arith.constant -1 : i32
    %77 = vector.broadcast %c-1_i32_35 : i32 to vector<1x256xi32>
    %78 = arith.addi %16, %77 : vector<1x256xi32>
    %c16_i32_36 = arith.constant 16 : i32
    %79 = vector.broadcast %c16_i32_36 : i32 to vector<1x256xi32>
    %80 = arith.cmpi slt, %78, %79 : vector<1x256xi32>
    %81 = arith.andi %76, %80 : vector<1x256xi1>
    %c0_i32_37 = arith.constant 0 : i32
    %82 = arith.sitofp %c0_i32_37 : i32 to f32
    %83 = vector.shape_cast %81 : vector<1x256xi1> to vector<1x256xi1>
    %84 = vector.broadcast %83 : vector<1x256xi1> to vector<8x256xi1>
    %85 = vector.broadcast %82 : f32 to vector<8x256xf32>
    %86 = arith.select %84, %72, %85 : vector<8x256xi1>, vector<8x256xf32>
    %c24 = arith.constant 24 : index
    %c0_38 = arith.constant 0 : index
    %87 = vector.load %arg7[%c24, %c0_38] : memref<72x256xf32, #tpu.memory_space<vmem>>, vector<8x256xf32>
    tpu.vector_store %arg7[%c24, %c0_38], %86 {strides = array<i32>} : memref<72x256xf32, #tpu.memory_space<vmem>>, vector<8x256xf32>,
    %c0_39 = arith.constant 0 : index
    %c128_40 = arith.constant 128 : index
    %88 = vector.load %arg6[%c0_39, %c128_40] : memref<8x512xf32, #tpu.memory_space<vmem>>, vector<8x256xf32>
    %c0_i32_41 = arith.constant 0 : i32
    %89 = vector.broadcast %c0_i32_41 : i32 to vector<1x256xi32>
    %90 = arith.addi %16, %89 : vector<1x256xi32>
    %c0_i32_42 = arith.constant 0 : i32
    %91 = vector.broadcast %c0_i32_42 : i32 to vector<1x256xi32>
    %92 = arith.cmpi sge, %90, %91 : vector<1x256xi32>
    %c0_i32_43 = arith.constant 0 : i32
    %93 = vector.broadcast %c0_i32_43 : i32 to vector<1x256xi32>
    %94 = arith.addi %16, %93 : vector<1x256xi32>
    %c16_i32_44 = arith.constant 16 : i32
    %95 = vector.broadcast %c16_i32_44 : i32 to vector<1x256xi32>
    %96 = arith.cmpi slt, %94, %95 : vector<1x256xi32>
    %97 = arith.andi %92, %96 : vector<1x256xi1>
    %c0_i32_45 = arith.constant 0 : i32
    %98 = arith.sitofp %c0_i32_45 : i32 to f32
    %99 = vector.shape_cast %97 : vector<1x256xi1> to vector<1x256xi1>
    %100 = vector.broadcast %99 : vector<1x256xi1> to vector<8x256xi1>
    %101 = vector.broadcast %98 : f32 to vector<8x256xf32>
    %102 = arith.select %100, %88, %101 : vector<8x256xi1>, vector<8x256xf32>
    %c32 = arith.constant 32 : index
    %c0_46 = arith.constant 0 : index
    %103 = vector.load %arg7[%c32, %c0_46] : memref<72x256xf32, #tpu.memory_space<vmem>>, vector<8x256xf32>
    tpu.vector_store %arg7[%c32, %c0_46], %102 {strides = array<i32>} : memref<72x256xf32, #tpu.memory_space<vmem>>, vector<8x256xf32>,
    %c0_47 = arith.constant 0 : index
    %c129 = arith.constant 129 : index
    %104 = vector.load %arg6[%c0_47, %c129] : memref<8x512xf32, #tpu.memory_space<vmem>>, vector<8x256xf32>
    %c1_i32_48 = arith.constant 1 : i32
    %105 = vector.broadcast %c1_i32_48 : i32 to vector<1x256xi32>
    %106 = arith.addi %16, %105 : vector<1x256xi32>
    %c0_i32_49 = arith.constant 0 : i32
    %107 = vector.broadcast %c0_i32_49 : i32 to vector<1x256xi32>
    %108 = arith.cmpi sge, %106, %107 : vector<1x256xi32>
    %c1_i32_50 = arith.constant 1 : i32
    %109 = vector.broadcast %c1_i32_50 : i32 to vector<1x256xi32>
    %110 = arith.addi %16, %109 : vector<1x256xi32>
    %c16_i32_51 = arith.constant 16 : i32
    %111 = vector.broadcast %c16_i32_51 : i32 to vector<1x256xi32>
    %112 = arith.cmpi slt, %110, %111 : vector<1x256xi32>
    %113 = arith.andi %108, %112 : vector<1x256xi1>
    %c0_i32_52 = arith.constant 0 : i32
    %114 = arith.sitofp %c0_i32_52 : i32 to f32
    %115 = vector.shape_cast %113 : vector<1x256xi1> to vector<1x256xi1>
    %116 = vector.broadcast %115 : vector<1x256xi1> to vector<8x256xi1>
    %117 = vector.broadcast %114 : f32 to vector<8x256xf32>
    %118 = arith.select %116, %104, %117 : vector<8x256xi1>, vector<8x256xf32>
    %c40 = arith.constant 40 : index
    %c0_53 = arith.constant 0 : index
    %119 = vector.load %arg7[%c40, %c0_53] : memref<72x256xf32, #tpu.memory_space<vmem>>, vector<8x256xf32>
    tpu.vector_store %arg7[%c40, %c0_53], %118 {strides = array<i32>} : memref<72x256xf32, #tpu.memory_space<vmem>>, vector<8x256xf32>,
    %c0_54 = arith.constant 0 : index
    %c143 = arith.constant 143 : index
    %120 = vector.load %arg6[%c0_54, %c143] : memref<8x512xf32, #tpu.memory_space<vmem>>, vector<8x256xf32>
    %c-1_i32_55 = arith.constant -1 : i32
    %121 = vector.broadcast %c-1_i32_55 : i32 to vector<1x256xi32>
    %122 = arith.addi %16, %121 : vector<1x256xi32>
    %c0_i32_56 = arith.constant 0 : i32
    %123 = vector.broadcast %c0_i32_56 : i32 to vector<1x256xi32>
    %124 = arith.cmpi sge, %122, %123 : vector<1x256xi32>
    %c-1_i32_57 = arith.constant -1 : i32
    %125 = vector.broadcast %c-1_i32_57 : i32 to vector<1x256xi32>
    %126 = arith.addi %16, %125 : vector<1x256xi32>
    %c16_i32_58 = arith.constant 16 : i32
    %127 = vector.broadcast %c16_i32_58 : i32 to vector<1x256xi32>
    %128 = arith.cmpi slt, %126, %127 : vector<1x256xi32>
    %129 = arith.andi %124, %128 : vector<1x256xi1>
    %c0_i32_59 = arith.constant 0 : i32
    %130 = arith.sitofp %c0_i32_59 : i32 to f32
    %131 = vector.shape_cast %129 : vector<1x256xi1> to vector<1x256xi1>
    %132 = vector.broadcast %131 : vector<1x256xi1> to vector<8x256xi1>
    %133 = vector.broadcast %130 : f32 to vector<8x256xf32>
    %134 = arith.select %132, %120, %133 : vector<8x256xi1>, vector<8x256xf32>
    %c48 = arith.constant 48 : index
    %c0_60 = arith.constant 0 : index
    %135 = vector.load %arg7[%c48, %c0_60] : memref<72x256xf32, #tpu.memory_space<vmem>>, vector<8x256xf32>
    tpu.vector_store %arg7[%c48, %c0_60], %134 {strides = array<i32>} : memref<72x256xf32, #tpu.memory_space<vmem>>, vector<8x256xf32>,
    %c0_61 = arith.constant 0 : index
    %c144 = arith.constant 144 : index
    %136 = vector.load %arg6[%c0_61, %c144] : memref<8x512xf32, #tpu.memory_space<vmem>>, vector<8x256xf32>
    %c0_i32_62 = arith.constant 0 : i32
    %137 = vector.broadcast %c0_i32_62 : i32 to vector<1x256xi32>
    %138 = arith.addi %16, %137 : vector<1x256xi32>
    %c0_i32_63 = arith.constant 0 : i32
    %139 = vector.broadcast %c0_i32_63 : i32 to vector<1x256xi32>
    %140 = arith.cmpi sge, %138, %139 : vector<1x256xi32>
    %c0_i32_64 = arith.constant 0 : i32
    %141 = vector.broadcast %c0_i32_64 : i32 to vector<1x256xi32>
    %142 = arith.addi %16, %141 : vector<1x256xi32>
    %c16_i32_65 = arith.constant 16 : i32
    %143 = vector.broadcast %c16_i32_65 : i32 to vector<1x256xi32>
    %144 = arith.cmpi slt, %142, %143 : vector<1x256xi32>
    %145 = arith.andi %140, %144 : vector<1x256xi1>
    %c0_i32_66 = arith.constant 0 : i32
    %146 = arith.sitofp %c0_i32_66 : i32 to f32
    %147 = vector.shape_cast %145 : vector<1x256xi1> to vector<1x256xi1>
    %148 = vector.broadcast %147 : vector<1x256xi1> to vector<8x256xi1>
    %149 = vector.broadcast %146 : f32 to vector<8x256xf32>
    %150 = arith.select %148, %136, %149 : vector<8x256xi1>, vector<8x256xf32>
    %c56 = arith.constant 56 : index
    %c0_67 = arith.constant 0 : index
    %151 = vector.load %arg7[%c56, %c0_67] : memref<72x256xf32, #tpu.memory_space<vmem>>, vector<8x256xf32>
    tpu.vector_store %arg7[%c56, %c0_67], %150 {strides = array<i32>} : memref<72x256xf32, #tpu.memory_space<vmem>>, vector<8x256xf32>,
    %c0_68 = arith.constant 0 : index
    %c145 = arith.constant 145 : index
    %152 = vector.load %arg6[%c0_68, %c145] : memref<8x512xf32, #tpu.memory_space<vmem>>, vector<8x256xf32>
    %c1_i32_69 = arith.constant 1 : i32
    %153 = vector.broadcast %c1_i32_69 : i32 to vector<1x256xi32>
    %154 = arith.addi %16, %153 : vector<1x256xi32>
    %c0_i32_70 = arith.constant 0 : i32
    %155 = vector.broadcast %c0_i32_70 : i32 to vector<1x256xi32>
    %156 = arith.cmpi sge, %154, %155 : vector<1x256xi32>
    %c1_i32_71 = arith.constant 1 : i32
    %157 = vector.broadcast %c1_i32_71 : i32 to vector<1x256xi32>
    %158 = arith.addi %16, %157 : vector<1x256xi32>
    %c16_i32_72 = arith.constant 16 : i32
    %159 = vector.broadcast %c16_i32_72 : i32 to vector<1x256xi32>
    %160 = arith.cmpi slt, %158, %159 : vector<1x256xi32>
    %161 = arith.andi %156, %160 : vector<1x256xi1>
    %c0_i32_73 = arith.constant 0 : i32
    %162 = arith.sitofp %c0_i32_73 : i32 to f32
    %163 = vector.shape_cast %161 : vector<1x256xi1> to vector<1x256xi1>
    %164 = vector.broadcast %163 : vector<1x256xi1> to vector<8x256xi1>
    %165 = vector.broadcast %162 : f32 to vector<8x256xf32>
    %166 = arith.select %164, %152, %165 : vector<8x256xi1>, vector<8x256xf32>
    %c64 = arith.constant 64 : index
    %c0_74 = arith.constant 0 : index
    %167 = vector.load %arg7[%c64, %c0_74] : memref<72x256xf32, #tpu.memory_space<vmem>>, vector<8x256xf32>
    tpu.vector_store %arg7[%c64, %c0_74], %166 {strides = array<i32>} : memref<72x256xf32, #tpu.memory_space<vmem>>, vector<8x256xf32>,
    %c0_75 = arith.constant 0 : index
    %c0_76 = arith.constant 0 : index
    %168 = vector.load %arg7[%c0_75, %c0_76] : memref<72x256xf32, #tpu.memory_space<vmem>>, vector<72x256xf32>
    %c0_77 = arith.constant 0 : index
    %c0_78 = arith.constant 0 : index
    %169 = vector.load %arg2[%c0_77, %c0_78] : memref<8x72xf32, #tpu.memory_space<vmem>>, vector<8x72xf32>
    %cst_79 = arith.constant dense<0.000000e+00> : vector<8x256xf32>
    %170 = tpu.matmul %169, %168, %cst_79 {dimension_numbers = #tpu.dot_dimension_numbers<[1], [0], [0], [1], [0, 0, 1, 1], [], []>} : vector<8x72xf32>, vector<72x256xf32>, vector<8x256xf32> -> vector<8x256xf32>
    %171 = vector.broadcast %21 : vector<8x1xf32> to vector<8x256xf32>
    %172 = arith.addf %170, %171 : vector<8x256xf32>
    %cst_80 = arith.constant 0.000000e+00 : f32
    %173 = vector.broadcast %cst_80 : f32 to vector<8x256xf32>
    %174 = arith.maximumf %172, %173 : vector<8x256xf32>
    %c0_81 = arith.constant 0 : index
    %c128_82 = arith.constant 128 : index
    %175 = vector.load %arg6[%c0_81, %c128_82] : memref<8x512xf32, #tpu.memory_space<vmem>>, vector<8x256xf32>
    tpu.vector_store %arg6[%c0_81, %c128_82], %174 {strides = array<i32>} : memref<8x512xf32, #tpu.memory_space<vmem>>, vector<8x256xf32>,
    %c0_83 = arith.constant 0 : index
    %c111_84 = arith.constant 111 : index
    %176 = vector.load %arg6[%c0_83, %c111_84] : memref<8x512xf32, #tpu.memory_space<vmem>>, vector<8x256xf32>
    %c-1_i32_85 = arith.constant -1 : i32
    %177 = vector.broadcast %c-1_i32_85 : i32 to vector<1x256xi32>
    %178 = arith.addi %16, %177 : vector<1x256xi32>
    %c0_i32_86 = arith.constant 0 : i32
    %179 = vector.broadcast %c0_i32_86 : i32 to vector<1x256xi32>
    %180 = arith.cmpi sge, %178, %179 : vector<1x256xi32>
    %c-1_i32_87 = arith.constant -1 : i32
    %181 = vector.broadcast %c-1_i32_87 : i32 to vector<1x256xi32>
    %182 = arith.addi %16, %181 : vector<1x256xi32>
    %c16_i32_88 = arith.constant 16 : i32
    %183 = vector.broadcast %c16_i32_88 : i32 to vector<1x256xi32>
    %184 = arith.cmpi slt, %182, %183 : vector<1x256xi32>
    %185 = arith.andi %180, %184 : vector<1x256xi1>
    %c0_i32_89 = arith.constant 0 : i32
    %186 = arith.sitofp %c0_i32_89 : i32 to f32
    %187 = vector.shape_cast %185 : vector<1x256xi1> to vector<1x256xi1>
    %188 = vector.broadcast %187 : vector<1x256xi1> to vector<8x256xi1>
    %189 = vector.broadcast %186 : f32 to vector<8x256xf32>
    %190 = arith.select %188, %176, %189 : vector<8x256xi1>, vector<8x256xf32>
    %c0_90 = arith.constant 0 : index
    %c0_91 = arith.constant 0 : index
    %191 = vector.load %arg7[%c0_90, %c0_91] : memref<72x256xf32, #tpu.memory_space<vmem>>, vector<8x256xf32>
    tpu.vector_store %arg7[%c0_90, %c0_91], %190 {strides = array<i32>} : memref<72x256xf32, #tpu.memory_space<vmem>>, vector<8x256xf32>,
    %c0_92 = arith.constant 0 : index
    %c112_93 = arith.constant 112 : index
    %192 = vector.load %arg6[%c0_92, %c112_93] : memref<8x512xf32, #tpu.memory_space<vmem>>, vector<8x256xf32>
    %c0_i32_94 = arith.constant 0 : i32
    %193 = vector.broadcast %c0_i32_94 : i32 to vector<1x256xi32>
    %194 = arith.addi %16, %193 : vector<1x256xi32>
    %c0_i32_95 = arith.constant 0 : i32
    %195 = vector.broadcast %c0_i32_95 : i32 to vector<1x256xi32>
    %196 = arith.cmpi sge, %194, %195 : vector<1x256xi32>
    %c0_i32_96 = arith.constant 0 : i32
    %197 = vector.broadcast %c0_i32_96 : i32 to vector<1x256xi32>
    %198 = arith.addi %16, %197 : vector<1x256xi32>
    %c16_i32_97 = arith.constant 16 : i32
    %199 = vector.broadcast %c16_i32_97 : i32 to vector<1x256xi32>
    %200 = arith.cmpi slt, %198, %199 : vector<1x256xi32>
    %201 = arith.andi %196, %200 : vector<1x256xi1>
    %c0_i32_98 = arith.constant 0 : i32
    %202 = arith.sitofp %c0_i32_98 : i32 to f32
    %203 = vector.shape_cast %201 : vector<1x256xi1> to vector<1x256xi1>
    %204 = vector.broadcast %203 : vector<1x256xi1> to vector<8x256xi1>
    %205 = vector.broadcast %202 : f32 to vector<8x256xf32>
    %206 = arith.select %204, %192, %205 : vector<8x256xi1>, vector<8x256xf32>
    %c8_99 = arith.constant 8 : index
    %c0_100 = arith.constant 0 : index
    %207 = vector.load %arg7[%c8_99, %c0_100] : memref<72x256xf32, #tpu.memory_space<vmem>>, vector<8x256xf32>
    tpu.vector_store %arg7[%c8_99, %c0_100], %206 {strides = array<i32>} : memref<72x256xf32, #tpu.memory_space<vmem>>, vector<8x256xf32>,
    %c0_101 = arith.constant 0 : index
    %c113_102 = arith.constant 113 : index
    %208 = vector.load %arg6[%c0_101, %c113_102] : memref<8x512xf32, #tpu.memory_space<vmem>>, vector<8x256xf32>
    %c1_i32_103 = arith.constant 1 : i32
    %209 = vector.broadcast %c1_i32_103 : i32 to vector<1x256xi32>
    %210 = arith.addi %16, %209 : vector<1x256xi32>
    %c0_i32_104 = arith.constant 0 : i32
    %211 = vector.broadcast %c0_i32_104 : i32 to vector<1x256xi32>
    %212 = arith.cmpi sge, %210, %211 : vector<1x256xi32>
    %c1_i32_105 = arith.constant 1 : i32
    %213 = vector.broadcast %c1_i32_105 : i32 to vector<1x256xi32>
    %214 = arith.addi %16, %213 : vector<1x256xi32>
    %c16_i32_106 = arith.constant 16 : i32
    %215 = vector.broadcast %c16_i32_106 : i32 to vector<1x256xi32>
    %216 = arith.cmpi slt, %214, %215 : vector<1x256xi32>
    %217 = arith.andi %212, %216 : vector<1x256xi1>
    %c0_i32_107 = arith.constant 0 : i32
    %218 = arith.sitofp %c0_i32_107 : i32 to f32
    %219 = vector.shape_cast %217 : vector<1x256xi1> to vector<1x256xi1>
    %220 = vector.broadcast %219 : vector<1x256xi1> to vector<8x256xi1>
    %221 = vector.broadcast %218 : f32 to vector<8x256xf32>
    %222 = arith.select %220, %208, %221 : vector<8x256xi1>, vector<8x256xf32>
    %c16_108 = arith.constant 16 : index
    %c0_109 = arith.constant 0 : index
    %223 = vector.load %arg7[%c16_108, %c0_109] : memref<72x256xf32, #tpu.memory_space<vmem>>, vector<8x256xf32>
    tpu.vector_store %arg7[%c16_108, %c0_109], %222 {strides = array<i32>} : memref<72x256xf32, #tpu.memory_space<vmem>>, vector<8x256xf32>,
    %c0_110 = arith.constant 0 : index
    %c127_111 = arith.constant 127 : index
    %224 = vector.load %arg6[%c0_110, %c127_111] : memref<8x512xf32, #tpu.memory_space<vmem>>, vector<8x256xf32>
    %c-1_i32_112 = arith.constant -1 : i32
    %225 = vector.broadcast %c-1_i32_112 : i32 to vector<1x256xi32>
    %226 = arith.addi %16, %225 : vector<1x256xi32>
    %c0_i32_113 = arith.constant 0 : i32
    %227 = vector.broadcast %c0_i32_113 : i32 to vector<1x256xi32>
    %228 = arith.cmpi sge, %226, %227 : vector<1x256xi32>
    %c-1_i32_114 = arith.constant -1 : i32
    %229 = vector.broadcast %c-1_i32_114 : i32 to vector<1x256xi32>
    %230 = arith.addi %16, %229 : vector<1x256xi32>
    %c16_i32_115 = arith.constant 16 : i32
    %231 = vector.broadcast %c16_i32_115 : i32 to vector<1x256xi32>
    %232 = arith.cmpi slt, %230, %231 : vector<1x256xi32>
    %233 = arith.andi %228, %232 : vector<1x256xi1>
    %c0_i32_116 = arith.constant 0 : i32
    %234 = arith.sitofp %c0_i32_116 : i32 to f32
    %235 = vector.shape_cast %233 : vector<1x256xi1> to vector<1x256xi1>
    %236 = vector.broadcast %235 : vector<1x256xi1> to vector<8x256xi1>
    %237 = vector.broadcast %234 : f32 to vector<8x256xf32>
    %238 = arith.select %236, %224, %237 : vector<8x256xi1>, vector<8x256xf32>
    %c24_117 = arith.constant 24 : index
    %c0_118 = arith.constant 0 : index
    %239 = vector.load %arg7[%c24_117, %c0_118] : memref<72x256xf32, #tpu.memory_space<vmem>>, vector<8x256xf32>
    tpu.vector_store %arg7[%c24_117, %c0_118], %238 {strides = array<i32>} : memref<72x256xf32, #tpu.memory_space<vmem>>, vector<8x256xf32>,
    %c0_119 = arith.constant 0 : index
    %c128_120 = arith.constant 128 : index
    %240 = vector.load %arg6[%c0_119, %c128_120] : memref<8x512xf32, #tpu.memory_space<vmem>>, vector<8x256xf32>
    %c0_i32_121 = arith.constant 0 : i32
    %241 = vector.broadcast %c0_i32_121 : i32 to vector<1x256xi32>
    %242 = arith.addi %16, %241 : vector<1x256xi32>
    %c0_i32_122 = arith.constant 0 : i32
    %243 = vector.broadcast %c0_i32_122 : i32 to vector<1x256xi32>
    %244 = arith.cmpi sge, %242, %243 : vector<1x256xi32>
    %c0_i32_123 = arith.constant 0 : i32
    %245 = vector.broadcast %c0_i32_123 : i32 to vector<1x256xi32>
    %246 = arith.addi %16, %245 : vector<1x256xi32>
    %c16_i32_124 = arith.constant 16 : i32
    %247 = vector.broadcast %c16_i32_124 : i32 to vector<1x256xi32>
    %248 = arith.cmpi slt, %246, %247 : vector<1x256xi32>
    %249 = arith.andi %244, %248 : vector<1x256xi1>
    %c0_i32_125 = arith.constant 0 : i32
    %250 = arith.sitofp %c0_i32_125 : i32 to f32
    %251 = vector.shape_cast %249 : vector<1x256xi1> to vector<1x256xi1>
    %252 = vector.broadcast %251 : vector<1x256xi1> to vector<8x256xi1>
    %253 = vector.broadcast %250 : f32 to vector<8x256xf32>
    %254 = arith.select %252, %240, %253 : vector<8x256xi1>, vector<8x256xf32>
    %c32_126 = arith.constant 32 : index
    %c0_127 = arith.constant 0 : index
    %255 = vector.load %arg7[%c32_126, %c0_127] : memref<72x256xf32, #tpu.memory_space<vmem>>, vector<8x256xf32>
    tpu.vector_store %arg7[%c32_126, %c0_127], %254 {strides = array<i32>} : memref<72x256xf32, #tpu.memory_space<vmem>>, vector<8x256xf32>,
    %c0_128 = arith.constant 0 : index
    %c129_129 = arith.constant 129 : index
    %256 = vector.load %arg6[%c0_128, %c129_129] : memref<8x512xf32, #tpu.memory_space<vmem>>, vector<8x256xf32>
    %c1_i32_130 = arith.constant 1 : i32
    %257 = vector.broadcast %c1_i32_130 : i32 to vector<1x256xi32>
    %258 = arith.addi %16, %257 : vector<1x256xi32>
    %c0_i32_131 = arith.constant 0 : i32
    %259 = vector.broadcast %c0_i32_131 : i32 to vector<1x256xi32>
    %260 = arith.cmpi sge, %258, %259 : vector<1x256xi32>
    %c1_i32_132 = arith.constant 1 : i32
    %261 = vector.broadcast %c1_i32_132 : i32 to vector<1x256xi32>
    %262 = arith.addi %16, %261 : vector<1x256xi32>
    %c16_i32_133 = arith.constant 16 : i32
    %263 = vector.broadcast %c16_i32_133 : i32 to vector<1x256xi32>
    %264 = arith.cmpi slt, %262, %263 : vector<1x256xi32>
    %265 = arith.andi %260, %264 : vector<1x256xi1>
    %c0_i32_134 = arith.constant 0 : i32
    %266 = arith.sitofp %c0_i32_134 : i32 to f32
    %267 = vector.shape_cast %265 : vector<1x256xi1> to vector<1x256xi1>
    %268 = vector.broadcast %267 : vector<1x256xi1> to vector<8x256xi1>
    %269 = vector.broadcast %266 : f32 to vector<8x256xf32>
    %270 = arith.select %268, %256, %269 : vector<8x256xi1>, vector<8x256xf32>
    %c40_135 = arith.constant 40 : index
    %c0_136 = arith.constant 0 : index
    %271 = vector.load %arg7[%c40_135, %c0_136] : memref<72x256xf32, #tpu.memory_space<vmem>>, vector<8x256xf32>
    tpu.vector_store %arg7[%c40_135, %c0_136], %270 {strides = array<i32>} : memref<72x256xf32, #tpu.memory_space<vmem>>, vector<8x256xf32>,
    %c0_137 = arith.constant 0 : index
    %c143_138 = arith.constant 143 : index
    %272 = vector.load %arg6[%c0_137, %c143_138] : memref<8x512xf32, #tpu.memory_space<vmem>>, vector<8x256xf32>
    %c-1_i32_139 = arith.constant -1 : i32
    %273 = vector.broadcast %c-1_i32_139 : i32 to vector<1x256xi32>
    %274 = arith.addi %16, %273 : vector<1x256xi32>
    %c0_i32_140 = arith.constant 0 : i32
    %275 = vector.broadcast %c0_i32_140 : i32 to vector<1x256xi32>
    %276 = arith.cmpi sge, %274, %275 : vector<1x256xi32>
    %c-1_i32_141 = arith.constant -1 : i32
    %277 = vector.broadcast %c-1_i32_141 : i32 to vector<1x256xi32>
    %278 = arith.addi %16, %277 : vector<1x256xi32>
    %c16_i32_142 = arith.constant 16 : i32
    %279 = vector.broadcast %c16_i32_142 : i32 to vector<1x256xi32>
    %280 = arith.cmpi slt, %278, %279 : vector<1x256xi32>
    %281 = arith.andi %276, %280 : vector<1x256xi1>
    %c0_i32_143 = arith.constant 0 : i32
    %282 = arith.sitofp %c0_i32_143 : i32 to f32
    %283 = vector.shape_cast %281 : vector<1x256xi1> to vector<1x256xi1>
    %284 = vector.broadcast %283 : vector<1x256xi1> to vector<8x256xi1>
    %285 = vector.broadcast %282 : f32 to vector<8x256xf32>
    %286 = arith.select %284, %272, %285 : vector<8x256xi1>, vector<8x256xf32>
    %c48_144 = arith.constant 48 : index
    %c0_145 = arith.constant 0 : index
    %287 = vector.load %arg7[%c48_144, %c0_145] : memref<72x256xf32, #tpu.memory_space<vmem>>, vector<8x256xf32>
    tpu.vector_store %arg7[%c48_144, %c0_145], %286 {strides = array<i32>} : memref<72x256xf32, #tpu.memory_space<vmem>>, vector<8x256xf32>,
    %c0_146 = arith.constant 0 : index
    %c144_147 = arith.constant 144 : index
    %288 = vector.load %arg6[%c0_146, %c144_147] : memref<8x512xf32, #tpu.memory_space<vmem>>, vector<8x256xf32>
    %c0_i32_148 = arith.constant 0 : i32
    %289 = vector.broadcast %c0_i32_148 : i32 to vector<1x256xi32>
    %290 = arith.addi %16, %289 : vector<1x256xi32>
    %c0_i32_149 = arith.constant 0 : i32
    %291 = vector.broadcast %c0_i32_149 : i32 to vector<1x256xi32>
    %292 = arith.cmpi sge, %290, %291 : vector<1x256xi32>
    %c0_i32_150 = arith.constant 0 : i32
    %293 = vector.broadcast %c0_i32_150 : i32 to vector<1x256xi32>
    %294 = arith.addi %16, %293 : vector<1x256xi32>
    %c16_i32_151 = arith.constant 16 : i32
    %295 = vector.broadcast %c16_i32_151 : i32 to vector<1x256xi32>
    %296 = arith.cmpi slt, %294, %295 : vector<1x256xi32>
    %297 = arith.andi %292, %296 : vector<1x256xi1>
    %c0_i32_152 = arith.constant 0 : i32
    %298 = arith.sitofp %c0_i32_152 : i32 to f32
    %299 = vector.shape_cast %297 : vector<1x256xi1> to vector<1x256xi1>
    %300 = vector.broadcast %299 : vector<1x256xi1> to vector<8x256xi1>
    %301 = vector.broadcast %298 : f32 to vector<8x256xf32>
    %302 = arith.select %300, %288, %301 : vector<8x256xi1>, vector<8x256xf32>
    %c56_153 = arith.constant 56 : index
    %c0_154 = arith.constant 0 : index
    %303 = vector.load %arg7[%c56_153, %c0_154] : memref<72x256xf32, #tpu.memory_space<vmem>>, vector<8x256xf32>
    tpu.vector_store %arg7[%c56_153, %c0_154], %302 {strides = array<i32>} : memref<72x256xf32, #tpu.memory_space<vmem>>, vector<8x256xf32>,
    %c0_155 = arith.constant 0 : index
    %c145_156 = arith.constant 145 : index
    %304 = vector.load %arg6[%c0_155, %c145_156] : memref<8x512xf32, #tpu.memory_space<vmem>>, vector<8x256xf32>
    %c1_i32_157 = arith.constant 1 : i32
    %305 = vector.broadcast %c1_i32_157 : i32 to vector<1x256xi32>
    %306 = arith.addi %16, %305 : vector<1x256xi32>
    %c0_i32_158 = arith.constant 0 : i32
    %307 = vector.broadcast %c0_i32_158 : i32 to vector<1x256xi32>
    %308 = arith.cmpi sge, %306, %307 : vector<1x256xi32>
    %c1_i32_159 = arith.constant 1 : i32
    %309 = vector.broadcast %c1_i32_159 : i32 to vector<1x256xi32>
    %310 = arith.addi %16, %309 : vector<1x256xi32>
    %c16_i32_160 = arith.constant 16 : i32
    %311 = vector.broadcast %c16_i32_160 : i32 to vector<1x256xi32>
    %312 = arith.cmpi slt, %310, %311 : vector<1x256xi32>
    %313 = arith.andi %308, %312 : vector<1x256xi1>
    %c0_i32_161 = arith.constant 0 : i32
    %314 = arith.sitofp %c0_i32_161 : i32 to f32
    %315 = vector.shape_cast %313 : vector<1x256xi1> to vector<1x256xi1>
    %316 = vector.broadcast %315 : vector<1x256xi1> to vector<8x256xi1>
    %317 = vector.broadcast %314 : f32 to vector<8x256xf32>
    %318 = arith.select %316, %304, %317 : vector<8x256xi1>, vector<8x256xf32>
    %c64_162 = arith.constant 64 : index
    %c0_163 = arith.constant 0 : index
    %319 = vector.load %arg7[%c64_162, %c0_163] : memref<72x256xf32, #tpu.memory_space<vmem>>, vector<8x256xf32>
    tpu.vector_store %arg7[%c64_162, %c0_163], %318 {strides = array<i32>} : memref<72x256xf32, #tpu.memory_space<vmem>>, vector<8x256xf32>,
    %c0_164 = arith.constant 0 : index
    %c0_165 = arith.constant 0 : index
    %320 = vector.load %arg7[%c0_164, %c0_165] : memref<72x256xf32, #tpu.memory_space<vmem>>, vector<72x256xf32>
    %c0_166 = arith.constant 0 : index
    %c0_167 = arith.constant 0 : index
    %321 = vector.load %arg3[%c0_166, %c0_167] : memref<8x72xf32, #tpu.memory_space<vmem>>, vector<8x72xf32>
    %cst_168 = arith.constant dense<0.000000e+00> : vector<8x256xf32>
    %322 = tpu.matmul %321, %320, %cst_168 {dimension_numbers = #tpu.dot_dimension_numbers<[1], [0], [0], [1], [0, 0, 1, 1], [], []>} : vector<8x72xf32>, vector<72x256xf32>, vector<8x256xf32> -> vector<8x256xf32>
    %323 = vector.broadcast %22 : vector<8x1xf32> to vector<8x256xf32>
    %324 = arith.addf %322, %323 : vector<8x256xf32>
    %325 = arith.addf %324, %20 : vector<8x256xf32>
    %cst_169 = arith.constant 0.000000e+00 : f32
    %326 = vector.broadcast %cst_169 : f32 to vector<8x256xf32>
    %327 = arith.maximumf %325, %326 : vector<8x256xf32>
    %c0_170 = arith.constant 0 : index
    %c0_171 = arith.constant 0 : index
    %c0_172 = arith.constant 0 : index
    %328 = vector.load %arg5[%c0_170, %c0_171, %c0_172] : memref<1x8x256xf32, #tpu.memory_space<vmem>>, vector<1x8x256xf32>
    %329 = vector.shape_cast %328 : vector<1x8x256xf32> to vector<8x256xf32>
    %330 = vector.shape_cast %327 : vector<8x256xf32> to vector<1x8x256xf32>
    tpu.vector_store %arg5[%c0_170, %c0_171, %c0_172], %330 {strides = array<i32>} : memref<1x8x256xf32, #tpu.memory_space<vmem>>, vector<1x8x256xf32>,
    return
  }
  func.func @transform_0(%arg0: i32) -> (i32, i32, i32) {
    %c0_i32 = arith.constant 0 : i32
    %c0_i32_0 = arith.constant 0 : i32
    %c0_i32_1 = arith.constant 0 : i32
    return %arg0, %c0_i32, %c0_i32_0 : i32, i32, i32
  }
  func.func @transform_1(%arg0: i32) -> (i32, i32) {
    %c0_i32 = arith.constant 0 : i32
    %c0_i32_0 = arith.constant 0 : i32
    %c0_i32_1 = arith.constant 0 : i32
    return %c0_i32, %c0_i32_0 : i32, i32
  }
  func.func @transform_2(%arg0: i32) -> (i32, i32) {
    %c0_i32 = arith.constant 0 : i32
    %c0_i32_0 = arith.constant 0 : i32
    %c0_i32_1 = arith.constant 0 : i32
    return %c0_i32, %c0_i32_0 : i32, i32
  }
  func.func @transform_3(%arg0: i32) -> (i32, i32) {
    %c0_i32 = arith.constant 0 : i32
    %c0_i32_0 = arith.constant 0 : i32
    %c0_i32_1 = arith.constant 0 : i32
    return %c0_i32, %c0_i32_0 : i32, i32
  }
  func.func @transform_4(%arg0: i32) -> (i32, i32, i32) {
    %c0_i32 = arith.constant 0 : i32
    %c0_i32_0 = arith.constant 0 : i32
    %c0_i32_1 = arith.constant 0 : i32
    return %arg0, %c0_i32, %c0_i32_0 : i32, i32, i32
  }
}

</mosaic_0001>

<llo_original>
// kernel: tpu_custom_call.1
$region0: #{tpu_custom_call.1}
  #allocation0 [shape = 'u32[]', space=smem, size = 0x4, offset = 0x4, fixed_abs, tag = 'smem constant byte address 0x4 - core index']
  #allocation1 [shape = 'u32[72,128]{1,0:T(1,128)}', space=vmem, size = 0x9000, scoped, tag = 'internal scratch']
  #allocation2 [shape = 'f32[8,512]{1,0:T(8,128)}', space=vmem, size = 0x4000, scoped, tag = 'scratch operand']
  #allocation3 [shape = 'f32[72,256]{1,0:T(8,128)}', space=vmem, size = 0x12000, scoped, tag = 'scratch operand']
  %s0 = inlined_call_operand.hbm [shape: f32[2,8,256], index: 0, kind: input, shape index: {}]
  %s1 = inlined_call_operand.vmem [shape: f32[8,72], index: 1, kind: input, shape index: {}]
  %s2 = inlined_call_operand.hbm [shape: f32[8,72], index: 2, kind: input, shape index: {}]
  %s3 = inlined_call_operand.vmem [shape: f32[8,2], index: 3, kind: input, shape index: {}]
  %s4 = inlined_call_operand.hbm [shape: f32[2,8,256], index: 4, kind: output, shape index: {}]
  %s5 = sld [smem:[#allocation0]]
  $region57: #{tpu_custom_call.1} parent=0
    _
  %s7 = ssub.s32 1, %s5
  %s8 = scalar_select 0, %s7, %s5
  $region1: #{tpu_custom_call.1} parent=0
    #allocation4 [shape = 'u8[16384]{0}', space=vmem, size = 0x4000, scoped, tag = 'input window, operand 0']
    #allocation5 [shape = 's32[2]{0}', space=sflag, size = 0x8, scoped, tag = 'scoped memory for tpu_custom_call.1']
    #allocation6 [shape = 's32[2]{0}', space=sflag, size = 0x8, scoped, tag = 'scoped memory for tpu_custom_call.1']
    #allocation7 [shape = 'u8[4096]{0}', space=vmem, size = 0x1000, scoped, tag = 'input window, operand 2, single buffered']
    #allocation8 [shape = 's32[1]{0}', space=sflag, size = 0x4, scoped, tag = 'scoped memory for tpu_custom_call.1']
    #allocation9 [shape = 'u8[16384]{0}', space=vmem, size = 0x4000, scoped, tag = 'output window, operand 0']
    %9 = vsyncpa [#allocation5], 0
    %s10 = scalar_lea.sflag [#allocation5], 1
    %11 = vsyncpa %s10, 0
    %12 = vsyncpa [#allocation8], 0
    %13 = vsyncpa [#allocation6], 0
    %s14 = scalar_lea.sflag [#allocation6], 1
    %15 = vsyncpa %s14, 0
    loop: start=0, step=1, limit=4
    $region2: #{tpu_custom_call.1} parent=1 // loop_pre_header
      _
    $region3: #{tpu_custom_call.1} parent=1 // loop_header
      %s17 = sphi 0, %s21
      %p18 = scmp.ge.s32.totalorder %s17, 4
      %s27 = sphi 0, %s29
      %s30 = sphi 0, %s27
      %s31 = sphi 0, %s30
      %s47 = sphi 0, %s31
      %s51 = sphi 0, %s51
      %s53 = sphi 0, %s51
      %s54 = sphi 0, %s53
      %s68 = sphi 0, %s54
      %s72 = sphi 0, %s72
      %s74 = sphi 0, %s72
      %s75 = sphi 0, %s74
      %s89 = sphi 0, %s75
      %s93 = sphi 0, %s93
      %s95 = sphi 0, %s93
      %s96 = sphi 0, %s95
      %s110 = sphi 0, %s96
      %s116 = sphi 0, %s118
      %s119 = sphi 0, %s116
      %s120 = sphi 0, %s119
      %s136 = sphi 0, %s120
    $region4: #{tpu_custom_call.1} parent=1 // loop_header_branch
      %20 = sbr.rel (%p18) target = $region8
    $region5: #{tpu_custom_call.1} parent=1 // loop_body
      %s22 = ssub.s32 %s17, 1
      %s23 = ssub.s32 %s17, 2
      %s24 = sadd.s32 %s17, 1
      %s25 = ssub.s32 %s17, %s24
      %p26 = scmp.eq.s32.totalorder %s25, 0
      %s28 = sadd.s32 %s27, 1
      %s29 = scalar_select %p26, %s27, %s28
      %p32 = pneg %p26
      %p33 = scmp.eq.s32.totalorder %s17, 1
      %p34 = por %p32, %p33
      %p35 = scmp.ne.s32.totalorder %s27, %s30
      %p36 = scmp.eq.s32.totalorder %s17, 0
      %p37 = por %p35, %p36
      %p38 = scmp.ne.s32.totalorder %s27, %s30
      %p39 = scmp.eq.s32.totalorder %s22, 1
      %p40 = por %p38, %p39
      %p41 = scmp.ne.s32.totalorder %s30, %s31
      %p42 = scmp.eq.s32.totalorder %s22, 0
      %p43 = por %p41, %p42
      %p44 = scmp.ne.s32.totalorder %s30, %s31
      %p45 = scmp.eq.s32.totalorder %s23, 1
      %p46 = por %p44, %p45
      %p48 = scmp.ne.s32.totalorder %s31, %s47
      %p49 = scmp.eq.s32.totalorder %s23, 0
      %p50 = por %p48, %p49
      %s52 = sadd.s32 %s51, 1
      %p55 = scmp.eq.s32.totalorder %s17, 1
      %p56 = scmp.ne.s32.totalorder %s51, %s53
      %p57 = scmp.eq.s32.totalorder %s17, 0
      %p58 = por %p56, %p57
      %p59 = scmp.ne.s32.totalorder %s51, %s53
      %p60 = scmp.eq.s32.totalorder %s22, 1
      %p61 = por %p59, %p60
      %p62 = scmp.ne.s32.totalorder %s53, %s54
      %p63 = scmp.eq.s32.totalorder %s22, 0
      %p64 = por %p62, %p63
      %p65 = scmp.ne.s32.totalorder %s53, %s54
      %p66 = scmp.eq.s32.totalorder %s23, 1
      %p67 = por %p65, %p66
      %p69 = scmp.ne.s32.totalorder %s54, %s68
      %p70 = scmp.eq.s32.totalorder %s23, 0
      %p71 = por %p69, %p70
      %s73 = sadd.s32 %s72, 1
      %p76 = scmp.eq.s32.totalorder %s17, 1
      %p77 = scmp.ne.s32.totalorder %s72, %s74
      %p78 = scmp.eq.s32.totalorder %s17, 0
      %p79 = por %p77, %p78
      %p80 = scmp.ne.s32.totalorder %s72, %s74
      %p81 = scmp.eq.s32.totalorder %s22, 1
      %p82 = por %p80, %p81
      %p83 = scmp.ne.s32.totalorder %s74, %s75
      %p84 = scmp.eq.s32.totalorder %s22, 0
      %p85 = por %p83, %p84
      %p86 = scmp.ne.s32.totalorder %s74, %s75
      %p87 = scmp.eq.s32.totalorder %s23, 1
      %p88 = por %p86, %p87
      %p90 = scmp.ne.s32.totalorder %s75, %s89
      %p91 = scmp.eq.s32.totalorder %s23, 0
      %p92 = por %p90, %p91
      %s94 = sadd.s32 %s93, 1
      %p97 = scmp.eq.s32.totalorder %s17, 1
      %p98 = scmp.ne.s32.totalorder %s93, %s95
      %p99 = scmp.eq.s32.totalorder %s17, 0
      %p100 = por %p98, %p99
      %p101 = scmp.ne.s32.totalorder %s93, %s95
      %p102 = scmp.eq.s32.totalorder %s22, 1
      %p103 = por %p101, %p102
      %p104 = scmp.ne.s32.totalorder %s95, %s96
      %p105 = scmp.eq.s32.totalorder %s22, 0
      %p106 = por %p104, %p105
      %p107 = scmp.ne.s32.totalorder %s95, %s96
      %p108 = scmp.eq.s32.totalorder %s23, 1
      %p109 = por %p107, %p108
      %p111 = scmp.ne.s32.totalorder %s96, %s110
      %p112 = scmp.eq.s32.totalorder %s23, 0
      %p113 = por %p111, %p112
      %s114 = ssub.s32 %s17, %s24
      %p115 = scmp.eq.s32.totalorder %s114, 0
      %s117 = sadd.s32 %s116, 1
      %s118 = scalar_select %p115, %s116, %s117
      %p121 = pneg %p115
      %p122 = scmp.eq.s32.totalorder %s17, 1
      %p123 = por %p121, %p122
      %p124 = scmp.ne.s32.totalorder %s116, %s119
      %p125 = scmp.eq.s32.totalorder %s17, 0
      %p126 = por %p124, %p125
      %p127 = scmp.ne.s32.totalorder %s116, %s119
      %p128 = scmp.eq.s32.totalorder %s22, 1
      %p129 = por %p127, %p128
      %p130 = scmp.ne.s32.totalorder %s119, %s120
      %p131 = scmp.eq.s32.totalorder %s22, 0
      %p132 = por %p130, %p131
      %p133 = scmp.ne.s32.totalorder %s119, %s120
      %p134 = scmp.eq.s32.totalorder %s23, 1
      %p135 = por %p133, %p134
      %p137 = scmp.ne.s32.totalorder %s120, %s136
      %p138 = scmp.eq.s32.totalorder %s23, 0
      %p139 = por %p137, %p138
      %p140 = scmp.le.s32.totalorder 1, %s17
      %p141 = scmp.lt.s32.totalorder %s17, 3
      %p142 = pnand %p140, %p141
      %p143 = pneg %p142
      // Predicated region
      $region9: #{tpu_custom_call.1} parent=5 // pred_check
        _
      $region10: #{tpu_custom_call.1} parent=5 // pred_check_branch
        %145 = sbr.rel (%p142) target = $region12
      $region11: #{tpu_custom_call.1} parent=5 // pred_region
        %s146 = ssub.s32 %s17, 1
        // Predicated region
        $region13: #{tpu_custom_call.1} parent=11 // pred_check
          %p147 = pneg %p64
        $region14: #{tpu_custom_call.1} parent=11 // pred_check_branch
          %149 = sbr.rel (%p147) target = $region16
        $region15: #{tpu_custom_call.1} parent=11 // pred_region
          _
        $region16: #{tpu_custom_call.1} parent=11 // pred_fallthru
          _
        // Predicated region
        $region17: #{tpu_custom_call.1} parent=11 // pred_check
          %p150 = pneg %p85
        $region18: #{tpu_custom_call.1} parent=11 // pred_check_branch
          %152 = sbr.rel (%p150) target = $region20
        $region19: #{tpu_custom_call.1} parent=11 // pred_region
          %154 = vsyncadd [#allocation8], 0
          %s156 = sshll.u32 %s2, 4
          %s157 = int_to_ptr.hbm [resolvable:$true] %s156
          %s158 = sshll.u32 [#allocation7], 4
          %s159 = int_to_ptr.vmem [resolvable:$true] %s158
          %161 = dma.hbm_to_vmem [thread:$0]  %s157, 128, %s159, [#allocation8]
        $region20: #{tpu_custom_call.1} parent=11 // pred_fallthru
          _
        // Predicated region
        $region21: #{tpu_custom_call.1} parent=11 // pred_check
          %p162 = pneg %p106
        $region22: #{tpu_custom_call.1} parent=11 // pred_check_branch
          %164 = sbr.rel (%p162) target = $region24
        $region23: #{tpu_custom_call.1} parent=11 // pred_region
          _
        $region24: #{tpu_custom_call.1} parent=11 // pred_fallthru
          _
      $region12: #{tpu_custom_call.1} parent=5 // pred_fallthru
        _
      %p165 = scmp.lt.s32.totalorder %s17, 2
      // Predicated region
      $region25: #{tpu_custom_call.1} parent=5 // pred_check
        %p166 = pneg %p165
      $region26: #{tpu_custom_call.1} parent=5 // pred_check_branch
        %168 = sbr.rel (%p166) target = $region28
      $region27: #{tpu_custom_call.1} parent=5 // pred_region
        // Predicated region
        $region29: #{tpu_custom_call.1} parent=27 // pred_check
          %p169 = pneg %p37
        $region30: #{tpu_custom_call.1} parent=27 // pred_check_branch
          %171 = sbr.rel (%p169) target = $region32
        $region31: #{tpu_custom_call.1} parent=27 // pred_region
          %s172 = sand.u32 %s27, 1
          %s173 = scalar_lea.sflag [#allocation5], %s172
          %s174 = sand.u32 %s27, 1
          %s175 = smul.addr %s174, 16
          %s176 = scalar_lea.vmem [#allocation4], %s175
          %178 = vsyncadd %s173, 0
          %s179 = smul.addr %s17, 2
          %s180 = smul.addr %s179, 8
          %s181 = scalar_lea.hbm %s0, %s180
          %s183 = sshll.u32 %s181, 4
          %s184 = int_to_ptr.hbm [resolvable:$true] %s183
          %s185 = sshll.u32 %s176, 4
          %s186 = int_to_ptr.vmem [resolvable:$true] %s185
          %188 = dma.hbm_to_vmem [thread:$0]  %s184, 256, %s186, %s173
        $region32: #{tpu_custom_call.1} parent=27 // pred_fallthru
          _
      $region28: #{tpu_custom_call.1} parent=5 // pred_fallthru
        _
      %p189 = scmp.le.s32.totalorder 1, %s17
      %p190 = scmp.lt.s32.totalorder %s17, 3
      %p191 = pnand %p189, %p190
      %p192 = pneg %p191
      // Predicated region
      $region33: #{tpu_custom_call.1} parent=5 // pred_check
        _
      $region34: #{tpu_custom_call.1} parent=5 // pred_check_branch
        %194 = sbr.rel (%p191) target = $region36
      $region35: #{tpu_custom_call.1} parent=5 // pred_region
        %s195 = ssub.s32 %s17, 1
        %s196 = sand.u32 %s30, 1
        %s197 = scalar_lea.sflag [#allocation5], %s196
        %s198 = sand.u32 %s30, 1
        %s199 = smul.addr %s198, 16
        %s200 = scalar_lea.vmem [#allocation4], %s199
        // Predicated region
        $region37: #{tpu_custom_call.1} parent=35 // pred_check
          %p201 = pneg %p43
        $region38: #{tpu_custom_call.1} parent=35 // pred_check_branch
          %203 = sbr.rel (%p201) target = $region40
        $region39: #{tpu_custom_call.1} parent=35 // pred_region
          %205 = dma.done %s197, 256
        $region40: #{tpu_custom_call.1} parent=35 // pred_fallthru
          _
        // Predicated region
        $region41: #{tpu_custom_call.1} parent=35 // pred_check
          %p206 = pneg %p85
        $region42: #{tpu_custom_call.1} parent=35 // pred_check_branch
          %208 = sbr.rel (%p206) target = $region44
        $region43: #{tpu_custom_call.1} parent=35 // pred_region
          %210 = dma.done [#allocation8], 128
        $region44: #{tpu_custom_call.1} parent=35 // pred_fallthru
          _
        %s211 = sand.u32 %s30, 1
        %s212 = scalar_lea.sflag [#allocation5], %s211
        %s213 = sand.u32 %s30, 1
        %s214 = smul.addr %s213, 16
        %s215 = scalar_lea.vmem [#allocation4], %s214
        %p216 = pneg %p43
        %p217 = pneg %p40
        %p218 = pneg %p64
        %p219 = pneg %p61
        %p220 = pneg %p85
        %p221 = pneg %p82
        %p222 = pneg %p106
        %p223 = pneg %p103
        %p224 = pneg %p132
        %p225 = pneg %p129
        %s226 = sand.u32 %s119, 1
        %s227 = scalar_lea.sflag [#allocation6], %s226
        %s228 = sand.u32 %s119, 1
        %s229 = smul.addr %s228, 16
        %s230 = scalar_lea.vmem [#allocation9], %s229
        %v231 = vlaneseq
        %v232 = vand.u32 %v231, 127
        %v233 = vadd.s32 %v232, 128
        %vm234 = vcmp.lt.s32.totalorder %v232, 0
        %v235 = vsub.s32 0, %v232
        %v236 = vsel %vm234, %v235, %v232
        %v237 = vshrl.u32 %v236, 4
        %v238 = vand.u32 %v236, 15
        %v239 = vsub.s32 0, %v238
        %v240 = vsel %vm234, %v239, %v238
        %vm241 = vcmp.lt.s32.totalorder %v233, 0
        %v242 = vsub.s32 0, %v233
        %v243 = vsel %vm241, %v242, %v233
        %v244 = vshrl.u32 %v243, 4
        %v245 = vand.u32 %v243, 15
        %v246 = vsub.s32 0, %v245
        %v247 = vsel %vm241, %v246, %v245
        %vm248 = vcmp.ne.s32.totalorder %v240, 0
        %vm249 = vcmp.ne.s32.totalorder %v247, 0
        %vm250 = vcmp.lt.s32.totalorder %v240, 0
        %vm251 = vcmp.lt.s32.totalorder %v247, 0
        %vm252 = vmand %vm250, %vm248
        %vm253 = vmand %vm251, %vm249
        %v254 = vadd.s32 %v240, 16
        %v255 = vadd.s32 %v247, 16
        %v256 = vsel %vm252, %v254, %v240
        %v257 = vsel %vm253, %v255, %v247
        %258 = vst [vmem:[#allocation2] sm:$0xff] 0.0
        %259 = vst [vmem:[#allocation2 + $0x8] sm:$0xff] 0.0
        %260 = vst [vmem:[#allocation2 + $0x10] sm:$0xff] 0.0
        %261 = vst [vmem:[#allocation2 + $0x18] sm:$0xff] 0.0
        %v262 = vld [vmem:[%s200] sm:$0xff]
        %v263 = vld [vmem:[%s200 + $0x8] sm:$0xff]
        %v264 = vld [vmem:[%s3] sm:$0xff]
        %265 = vst [vmem:[#allocation2 + $0x8] sm:$0xff] %v262
        %266 = vst [vmem:[#allocation2 + $0x10] sm:$0xff] %v263
        %v267 = vld [vmem:[#allocation2] sm:$0xff]
        %v268 = vld [vmem:[#allocation2 + $0x8] sm:$0xff]
        %v269 = vld [vmem:[#allocation2 + $0x10] sm:$0xff]
        %v270 = vadd.s32 %v256, 4294967295
        %v271 = vadd.s32 %v257, 4294967295
        %vm272 = vcmp.ge.s32.totalorder %v270, 0
        %vm273 = vcmp.ge.s32.totalorder %v271, 0
        %vm274 = vcmp.lt.s32.totalorder %v270, 16
        %vm275 = vcmp.lt.s32.totalorder %v271, 16
        %vm276 = vmand %vm272, %vm274
        %vm277 = vmand %vm273, %vm275
        %v278 = vsel %vm276, 1, 0
        %v279 = vsel %vm277, 1, 0
        %vm280 = vcmp.eq.s32.totalorder %v278, 1
        %vm281 = vcmp.eq.s32.totalorder %v279, 1
        %285 = vrot.lane.b32.xlu0 %v267, 17
        %v286 = vpop.permute.xlu0 %285
        %287 = vrot.lane.b32.xlu0 %v268, 17
        %v288 = vpop.permute.xlu0 %287
        %289 = vrot.lane.b32.xlu0 %v269, 17
        %v290 = vpop.permute.xlu0 %289
        %vm291 = vcmask 138240
        %v292 = vsel %vm291, %v286, %v288
        %v293 = vsel %vm291, %v288, %v290
        %v296 = vsel %vm280, %v292, 0.0
        %v297 = vsel %vm281, %v293, 0.0
        %298 = vst [vmem:[#allocation3] sm:$0xff] %v296
        %299 = vst [vmem:[#allocation3 + $0x8] sm:$0xff] %v297
        %v300 = vld [vmem:[#allocation2] sm:$0xff]
        %v301 = vld [vmem:[#allocation2 + $0x8] sm:$0xff]
        %v302 = vld [vmem:[#allocation2 + $0x10] sm:$0xff]
        %vm303 = vcmp.ge.s32.totalorder %v256, 0
        %vm304 = vcmp.ge.s32.totalorder %v257, 0
        %vm305 = vcmp.lt.s32.totalorder %v256, 16
        %vm306 = vcmp.lt.s32.totalorder %v257, 16
        %vm307 = vmand %vm303, %vm305
        %vm308 = vmand %vm304, %vm306
        %v309 = vsel %vm307, 1, 0
        %v310 = vsel %vm308, 1, 0
        %vm311 = vcmp.eq.s32.totalorder %v309, 1
        %vm312 = vcmp.eq.s32.totalorder %v310, 1
        %316 = vrot.lane.b32.xlu0 %v300, 16
        %v317 = vpop.permute.xlu0 %316
        %318 = vrot.lane.b32.xlu0 %v301, 16
        %v319 = vpop.permute.xlu0 %318
        %320 = vrot.lane.b32.xlu0 %v302, 16
        %v321 = vpop.permute.xlu0 %320
        %vm322 = vcmask 130048
        %v323 = vsel %vm322, %v317, %v319
        %v324 = vsel %vm322, %v319, %v321
        %v327 = vsel %vm311, %v323, 0.0
        %v328 = vsel %vm312, %v324, 0.0
        %329 = vst [vmem:[#allocation3 + $0x10] sm:$0xff] %v327
        %330 = vst [vmem:[#allocation3 + $0x18] sm:$0xff] %v328
        %v331 = vld [vmem:[#allocation2] sm:$0xff]
        %v332 = vld [vmem:[#allocation2 + $0x8] sm:$0xff]
        %v333 = vld [vmem:[#allocation2 + $0x10] sm:$0xff]
        %v334 = vadd.s32 %v256, 1
        %v335 = vadd.s32 %v257, 1
        %vm336 = vcmp.ge.s32.totalorder %v334, 0
        %vm337 = vcmp.ge.s32.totalorder %v335, 0
        %vm338 = vcmp.lt.s32.totalorder %v334, 16
        %vm339 = vcmp.lt.s32.totalorder %v335, 16
        %vm340 = vmand %vm336, %vm338
        %vm341 = vmand %vm337, %vm339
        %v342 = vsel %vm340, 1, 0
        %v343 = vsel %vm341, 1, 0
        %vm344 = vcmp.eq.s32.totalorder %v342, 1
        %vm345 = vcmp.eq.s32.totalorder %v343, 1
        %349 = vrot.lane.b32.xlu0 %v331, 15
        %v350 = vpop.permute.xlu0 %349
        %351 = vrot.lane.b32.xlu0 %v332, 15
        %v352 = vpop.permute.xlu0 %351
        %353 = vrot.lane.b32.xlu0 %v333, 15
        %v354 = vpop.permute.xlu0 %353
        %vm355 = vcmask 121856
        %v356 = vsel %vm355, %v350, %v352
        %v357 = vsel %vm355, %v352, %v354
        %v360 = vsel %vm344, %v356, 0.0
        %v361 = vsel %vm345, %v357, 0.0
        %362 = vst [vmem:[#allocation3 + $0x20] sm:$0xff] %v360
        %363 = vst [vmem:[#allocation3 + $0x28] sm:$0xff] %v361
        %v364 = vld [vmem:[#allocation2] sm:$0xff]
        %v365 = vld [vmem:[#allocation2 + $0x8] sm:$0xff]
        %v366 = vld [vmem:[#allocation2 + $0x10] sm:$0xff]
        %370 = vrot.lane.b32.xlu0 %v364, 1
        %v371 = vpop.permute.xlu0 %370
        %372 = vrot.lane.b32.xlu0 %v365, 1
        %v373 = vpop.permute.xlu0 %372
        %374 = vrot.lane.b32.xlu0 %v366, 1
        %v375 = vpop.permute.xlu0 %374
        %vm376 = vcmask 7168
        %v377 = vsel %vm376, %v371, %v373
        %v378 = vsel %vm376, %v373, %v375
        %v381 = vsel %vm280, %v377, 0.0
        %v382 = vsel %vm281, %v378, 0.0
        %383 = vst [vmem:[#allocation3 + $0x30] sm:$0xff] %v381
        %384 = vst [vmem:[#allocation3 + $0x38] sm:$0xff] %v382
        %v385 = vld [vmem:[#allocation2 + $0x8] sm:$0xff]
        %v386 = vld [vmem:[#allocation2 + $0x10] sm:$0xff]
        %v387 = vsel %vm311, %v385, 0.0
        %v388 = vsel %vm312, %v386, 0.0
        %389 = vst [vmem:[#allocation3 + $0x40] sm:$0xff] %v387
        %390 = vst [vmem:[#allocation3 + $0x48] sm:$0xff] %v388
        %v391 = vld [vmem:[#allocation2 + $0x8] sm:$0xff]
        %v392 = vld [vmem:[#allocation2 + $0x10] sm:$0xff]
        %v393 = vld [vmem:[#allocation2 + $0x18] sm:$0xff]
        %397 = vrot.lane.b32.xlu0 %v391, 127
        %v398 = vpop.permute.xlu0 %397
        %399 = vrot.lane.b32.xlu0 %v392, 127
        %v400 = vpop.permute.xlu0 %399
        %401 = vrot.lane.b32.xlu0 %v393, 127
        %v402 = vpop.permute.xlu0 %401
        %vm403 = vcmask 1039360
        %v404 = vsel %vm403, %v398, %v400
        %v405 = vsel %vm403, %v400, %v402
        %v408 = vsel %vm344, %v404, 0.0
        %v409 = vsel %vm345, %v405, 0.0
        %410 = vst [vmem:[#allocation3 + $0x50] sm:$0xff] %v408
        %411 = vst [vmem:[#allocation3 + $0x58] sm:$0xff] %v409
        %v412 = vld [vmem:[#allocation2 + $0x8] sm:$0xff]
        %v413 = vld [vmem:[#allocation2 + $0x10] sm:$0xff]
        %v414 = vld [vmem:[#allocation2 + $0x18] sm:$0xff]
        %418 = vrot.lane.b32.xlu0 %v412, 113
        %v419 = vpop.permute.xlu0 %418
        %420 = vrot.lane.b32.xlu0 %v413, 113
        %v421 = vpop.permute.xlu0 %420
        %422 = vrot.lane.b32.xlu0 %v414, 113
        %v423 = vpop.permute.xlu0 %422
        %vm424 = vcmask 924672
        %v425 = vsel %vm424, %v419, %v421
        %v426 = vsel %vm424, %v421, %v423
        %v429 = vsel %vm280, %v425, 0.0
        %v430 = vsel %vm281, %v426, 0.0
        %431 = vst [vmem:[#allocation3 + $0x60] sm:$0xff] %v429
        %432 = vst [vmem:[#allocation3 + $0x68] sm:$0xff] %v430
        %v433 = vld [vmem:[#allocation2 + $0x8] sm:$0xff]
        %v434 = vld [vmem:[#allocation2 + $0x10] sm:$0xff]
        %v435 = vld [vmem:[#allocation2 + $0x18] sm:$0xff]
        %439 = vrot.lane.b32.xlu0 %v433, 112
        %v440 = vpop.permute.xlu0 %439
        %441 = vrot.lane.b32.xlu0 %v434, 112
        %v442 = vpop.permute.xlu0 %441
        %443 = vrot.lane.b32.xlu0 %v435, 112
        %v444 = vpop.permute.xlu0 %443
        %vm445 = vcmask 916480
        %v446 = vsel %vm445, %v440, %v442
        %v447 = vsel %vm445, %v442, %v444
        %v450 = vsel %vm311, %v446, 0.0
        %v451 = vsel %vm312, %v447, 0.0
        %452 = vst [vmem:[#allocation3 + $0x70] sm:$0xff] %v450
        %453 = vst [vmem:[#allocation3 + $0x78] sm:$0xff] %v451
        %v454 = vld [vmem:[#allocation2 + $0x8] sm:$0xff]
        %v455 = vld [vmem:[#allocation2 + $0x10] sm:$0xff]
        %v456 = vld [vmem:[#allocation2 + $0x18] sm:$0xff]
        %460 = vrot.lane.b32.xlu0 %v454, 111
        %v461 = vpop.permute.xlu0 %460
        %462 = vrot.lane.b32.xlu0 %v455, 111
        %v463 = vpop.permute.xlu0 %462
        %464 = vrot.lane.b32.xlu0 %v456, 111
        %v465 = vpop.permute.xlu0 %464
        %vm466 = vcmask 908288
        %v467 = vsel %vm466, %v461, %v463
        %v468 = vsel %vm466, %v463, %v465
        %v471 = vsel %vm344, %v467, 0.0
        %v472 = vsel %vm345, %v468, 0.0
        %473 = vst [vmem:[#allocation3 + $0x80] sm:$0xff] %v471
        %474 = vst [vmem:[#allocation3 + $0x88] sm:$0xff] %v472
        %v475 = vld [vmem:[#allocation3] sm:$0xff]
        %v476 = vld [vmem:[#allocation3 + $0x8] sm:$0xff]
        %v477 = vld [vmem:[#allocation3 + $0x10] sm:$0xff]
        %v478 = vld [vmem:[#allocation3 + $0x18] sm:$0xff]
        %v479 = vld [vmem:[#allocation3 + $0x20] sm:$0xff]
        %v480 = vld [vmem:[#allocation3 + $0x28] sm:$0xff]
        %v481 = vld [vmem:[#allocation3 + $0x30] sm:$0xff]
        %v482 = vld [vmem:[#allocation3 + $0x38] sm:$0xff]
        %v483 = vld [vmem:[#allocation3 + $0x40] sm:$0xff]
        %v484 = vld [vmem:[#allocation3 + $0x48] sm:$0xff]
        %v485 = vld [vmem:[#allocation3 + $0x50] sm:$0xff]
        %v486 = vld [vmem:[#allocation3 + $0x58] sm:$0xff]
        %v487 = vld [vmem:[#allocation3 + $0x60] sm:$0xff]
        %v488 = vld [vmem:[#allocation3 + $0x68] sm:$0xff]
        %v489 = vld [vmem:[#allocation3 + $0x70] sm:$0xff]
        %v490 = vld [vmem:[#allocation3 + $0x78] sm:$0xff]
        %v491 = vld [vmem:[#allocation3 + $0x80] sm:$0xff]
        %v492 = vld [vmem:[#allocation3 + $0x88] sm:$0xff]
        %v493 = vld [vmem:[%s1] sm:$0xff]
        %495 = vset.pattern.permute.xlu0 0
        %496 = vperm.xlu0 %495, %v264
        %v497 = vpop.permute.xlu0 %496
        %vm499 = vcmask 588800
        %v501 = vsel %vm499, %v493, 0
        %503 = vmatpush.msra.mxu0 0.0
        %504 = vmatpush.msra.mxu0 0.0
        %505 = vmatpush.msra.mxu0 0.0
        %506 = vmatpush.msra.mxu0 0.0
        %507 = vmatpush.msra.mxu0 0.0
        %508 = vmatpush.msra.mxu0 0.0
        %509 = vmatpush.msra.mxu0 0.0
        %510 = vmatpush.msra.mxu0 %v491
        %511 = vmatpush.msra.mxu0 %v489
        %512 = vmatpush.msra.mxu0 %v487
        %513 = vmatpush.msra.mxu0 %v485
        %514 = vmatpush.msra.mxu0 %v483
        %515 = vmatpush.msra.mxu0 %v481
        %516 = vmatpush.msra.mxu0 %v479
        %517 = vmatpush.msra.mxu0 %v477
        %518 = vmatpush.msra.mxu0 %v475
        %519 = vmatmul.f32.gmra.mxu0 %v501
        %v520 = vpop.f32.mrf.mxu0
        %v521 = vadd.f32 %v497, %v520
        %522 = vdwg.mxu0
        %523 = vmatpush.msra.mxu0 0.0
        %524 = vmatpush.msra.mxu0 0.0
        %525 = vmatpush.msra.mxu0 0.0
        %526 = vmatpush.msra.mxu0 0.0
        %527 = vmatpush.msra.mxu0 0.0
        %528 = vmatpush.msra.mxu0 0.0
        %529 = vmatpush.msra.mxu0 0.0
        %530 = vmatpush.msra.mxu0 %v492
        %531 = vmatpush.msra.mxu0 %v490
        %532 = vmatpush.msra.mxu0 %v488
        %533 = vmatpush.msra.mxu0 %v486
        %534 = vmatpush.msra.mxu0 %v484
        %535 = vmatpush.msra.mxu0 %v482
        %536 = vmatpush.msra.mxu0 %v480
        %537 = vmatpush.msra.mxu0 %v478
        %538 = vmatpush.msra.mxu0 %v476
        %539 = vmatmul.f32.gmra.mxu0 %v501
        %v540 = vpop.f32.mrf.mxu0
        %v541 = vadd.f32 %v497, %v540
        %542 = vdwg.mxu0
        %v543 = vmax.f32 %v521, 0.0
        %v544 = vmax.f32 %v541, 0.0
        %545 = vst [vmem:[#allocation2 + $0x8] sm:$0xff] %v543
        %546 = vst [vmem:[#allocation2 + $0x10] sm:$0xff] %v544
        %v547 = vld [vmem:[#allocation2] sm:$0xff]
        %v548 = vld [vmem:[#allocation2 + $0x8] sm:$0xff]
        %v549 = vld [vmem:[#allocation2 + $0x10] sm:$0xff]
        %553 = vrot.lane.b32.xlu0 %v547, 17
        %v554 = vpop.permute.xlu0 %553
        %555 = vrot.lane.b32.xlu0 %v548, 17
        %v556 = vpop.permute.xlu0 %555
        %557 = vrot.lane.b32.xlu0 %v549, 17
        %v558 = vpop.permute.xlu0 %557
        %v559 = vsel %vm291, %v554, %v556
        %v560 = vsel %vm291, %v556, %v558
        %v563 = vsel %vm280, %v559, 0.0
        %v564 = vsel %vm281, %v560, 0.0
        %565 = vst [vmem:[#allocation3] sm:$0xff] %v563
        %566 = vst [vmem:[#allocation3 + $0x8] sm:$0xff] %v564
        %v567 = vld [vmem:[#allocation2] sm:$0xff]
        %v568 = vld [vmem:[#allocation2 + $0x8] sm:$0xff]
        %v569 = vld [vmem:[#allocation2 + $0x10] sm:$0xff]
        %573 = vrot.lane.b32.xlu0 %v567, 16
        %v574 = vpop.permute.xlu0 %573
        %575 = vrot.lane.b32.xlu0 %v568, 16
        %v576 = vpop.permute.xlu0 %575
        %577 = vrot.lane.b32.xlu0 %v569, 16
        %v578 = vpop.permute.xlu0 %577
        %v579 = vsel %vm322, %v574, %v576
        %v580 = vsel %vm322, %v576, %v578
        %v583 = vsel %vm311, %v579, 0.0
        %v584 = vsel %vm312, %v580, 0.0
        %585 = vst [vmem:[#allocation3 + $0x10] sm:$0xff] %v583
        %586 = vst [vmem:[#allocation3 + $0x18] sm:$0xff] %v584
        %v587 = vld [vmem:[#allocation2] sm:$0xff]
        %v588 = vld [vmem:[#allocation2 + $0x8] sm:$0xff]
        %v589 = vld [vmem:[#allocation2 + $0x10] sm:$0xff]
        %593 = vrot.lane.b32.xlu0 %v587, 15
        %v594 = vpop.permute.xlu0 %593
        %595 = vrot.lane.b32.xlu0 %v588, 15
        %v596 = vpop.permute.xlu0 %595
        %597 = vrot.lane.b32.xlu0 %v589, 15
        %v598 = vpop.permute.xlu0 %597
        %v599 = vsel %vm355, %v594, %v596
        %v600 = vsel %vm355, %v596, %v598
        %v603 = vsel %vm344, %v599, 0.0
        %v604 = vsel %vm345, %v600, 0.0
        %605 = vst [vmem:[#allocation3 + $0x20] sm:$0xff] %v603
        %606 = vst [vmem:[#allocation3 + $0x28] sm:$0xff] %v604
        %v607 = vld [vmem:[#allocation2] sm:$0xff]
        %v608 = vld [vmem:[#allocation2 + $0x8] sm:$0xff]
        %v609 = vld [vmem:[#allocation2 + $0x10] sm:$0xff]
        %613 = vrot.lane.b32.xlu0 %v607, 1
        %v614 = vpop.permute.xlu0 %613
        %615 = vrot.lane.b32.xlu0 %v608, 1
        %v616 = vpop.permute.xlu0 %615
        %617 = vrot.lane.b32.xlu0 %v609, 1
        %v618 = vpop.permute.xlu0 %617
        %v619 = vsel %vm376, %v614, %v616
        %v620 = vsel %vm376, %v616, %v618
        %v623 = vsel %vm280, %v619, 0.0
        %v624 = vsel %vm281, %v620, 0.0
        %625 = vst [vmem:[#allocation3 + $0x30] sm:$0xff] %v623
        %626 = vst [vmem:[#allocation3 + $0x38] sm:$0xff] %v624
        %v627 = vld [vmem:[#allocation2 + $0x8] sm:$0xff]
        %v628 = vld [vmem:[#allocation2 + $0x10] sm:$0xff]
        %v629 = vsel %vm311, %v627, 0.0
        %v630 = vsel %vm312, %v628, 0.0
        %631 = vst [vmem:[#allocation3 + $0x40] sm:$0xff] %v629
        %632 = vst [vmem:[#allocation3 + $0x48] sm:$0xff] %v630
        %v633 = vld [vmem:[#allocation2 + $0x8] sm:$0xff]
        %v634 = vld [vmem:[#allocation2 + $0x10] sm:$0xff]
        %v635 = vld [vmem:[#allocation2 + $0x18] sm:$0xff]
        %639 = vrot.lane.b32.xlu0 %v633, 127
        %v640 = vpop.permute.xlu0 %639
        %641 = vrot.lane.b32.xlu0 %v634, 127
        %v642 = vpop.permute.xlu0 %641
        %643 = vrot.lane.b32.xlu0 %v635, 127
        %v644 = vpop.permute.xlu0 %643
        %v645 = vsel %vm403, %v640, %v642
        %v646 = vsel %vm403, %v642, %v644
        %v649 = vsel %vm344, %v645, 0.0
        %v650 = vsel %vm345, %v646, 0.0
        %651 = vst [vmem:[#allocation3 + $0x50] sm:$0xff] %v649
        %652 = vst [vmem:[#allocation3 + $0x58] sm:$0xff] %v650
        %v653 = vld [vmem:[#allocation2 + $0x8] sm:$0xff]
        %v654 = vld [vmem:[#allocation2 + $0x10] sm:$0xff]
        %v655 = vld [vmem:[#allocation2 + $0x18] sm:$0xff]
        %659 = vrot.lane.b32.xlu0 %v653, 113
        %v660 = vpop.permute.xlu0 %659
        %661 = vrot.lane.b32.xlu0 %v654, 113
        %v662 = vpop.permute.xlu0 %661
        %663 = vrot.lane.b32.xlu0 %v655, 113
        %v664 = vpop.permute.xlu0 %663
        %v665 = vsel %vm424, %v660, %v662
        %v666 = vsel %vm424, %v662, %v664
        %v669 = vsel %vm280, %v665, 0.0
        %v670 = vsel %vm281, %v666, 0.0
        %671 = vst [vmem:[#allocation3 + $0x60] sm:$0xff] %v669
        %672 = vst [vmem:[#allocation3 + $0x68] sm:$0xff] %v670
        %v673 = vld [vmem:[#allocation2 + $0x8] sm:$0xff]
        %v674 = vld [vmem:[#allocation2 + $0x10] sm:$0xff]
        %v675 = vld [vmem:[#allocation2 + $0x18] sm:$0xff]
        %679 = vrot.lane.b32.xlu0 %v673, 112
        %v680 = vpop.permute.xlu0 %679
        %681 = vrot.lane.b32.xlu0 %v674, 112
        %v682 = vpop.permute.xlu0 %681
        %683 = vrot.lane.b32.xlu0 %v675, 112
        %v684 = vpop.permute.xlu0 %683
        %v685 = vsel %vm445, %v680, %v682
        %v686 = vsel %vm445, %v682, %v684
        %v689 = vsel %vm311, %v685, 0.0
        %v690 = vsel %vm312, %v686, 0.0
        %691 = vst [vmem:[#allocation3 + $0x70] sm:$0xff] %v689
        %692 = vst [vmem:[#allocation3 + $0x78] sm:$0xff] %v690
        %v693 = vld [vmem:[#allocation2 + $0x8] sm:$0xff]
        %v694 = vld [vmem:[#allocation2 + $0x10] sm:$0xff]
        %v695 = vld [vmem:[#allocation2 + $0x18] sm:$0xff]
        %699 = vrot.lane.b32.xlu0 %v693, 111
        %v700 = vpop.permute.xlu0 %699
        %701 = vrot.lane.b32.xlu0 %v694, 111
        %v702 = vpop.permute.xlu0 %701
        %703 = vrot.lane.b32.xlu0 %v695, 111
        %v704 = vpop.permute.xlu0 %703
        %v705 = vsel %vm466, %v700, %v702
        %v706 = vsel %vm466, %v702, %v704
        %v709 = vsel %vm344, %v705, 0.0
        %v710 = vsel %vm345, %v706, 0.0
        %711 = vst [vmem:[#allocation3 + $0x80] sm:$0xff] %v709
        %712 = vst [vmem:[#allocation3 + $0x88] sm:$0xff] %v710
        %v713 = vld [vmem:[#allocation3] sm:$0xff]
        %v714 = vld [vmem:[#allocation3 + $0x8] sm:$0xff]
        %v715 = vld [vmem:[#allocation3 + $0x10] sm:$0xff]
        %v716 = vld [vmem:[#allocation3 + $0x18] sm:$0xff]
        %v717 = vld [vmem:[#allocation3 + $0x20] sm:$0xff]
        %v718 = vld [vmem:[#allocation3 + $0x28] sm:$0xff]
        %v719 = vld [vmem:[#allocation3 + $0x30] sm:$0xff]
        %v720 = vld [vmem:[#allocation3 + $0x38] sm:$0xff]
        %v721 = vld [vmem:[#allocation3 + $0x40] sm:$0xff]
        %v722 = vld [vmem:[#allocation3 + $0x48] sm:$0xff]
        %v723 = vld [vmem:[#allocation3 + $0x50] sm:$0xff]
        %v724 = vld [vmem:[#allocation3 + $0x58] sm:$0xff]
        %v725 = vld [vmem:[#allocation3 + $0x60] sm:$0xff]
        %v726 = vld [vmem:[#allocation3 + $0x68] sm:$0xff]
        %v727 = vld [vmem:[#allocation3 + $0x70] sm:$0xff]
        %v728 = vld [vmem:[#allocation3 + $0x78] sm:$0xff]
        %v729 = vld [vmem:[#allocation3 + $0x80] sm:$0xff]
        %v730 = vld [vmem:[#allocation3 + $0x88] sm:$0xff]
        %v731 = vld [vmem:[#allocation7] sm:$0xff]
        %732 = vset.pattern.permute.xlu0 1
        %733 = vperm.xlu0 %732, %v264
        %v734 = vpop.permute.xlu0 %733
        %v737 = vsel %vm499, %v731, 0
        %739 = vmatpush.msra.mxu0 0.0
        %740 = vmatpush.msra.mxu0 0.0
        %741 = vmatpush.msra.mxu0 0.0
        %742 = vmatpush.msra.mxu0 0.0
        %743 = vmatpush.msra.mxu0 0.0
        %744 = vmatpush.msra.mxu0 0.0
        %745 = vmatpush.msra.mxu0 0.0
        %746 = vmatpush.msra.mxu0 %v729
        %747 = vmatpush.msra.mxu0 %v727
        %748 = vmatpush.msra.mxu0 %v725
        %749 = vmatpush.msra.mxu0 %v723
        %750 = vmatpush.msra.mxu0 %v721
        %751 = vmatpush.msra.mxu0 %v719
        %752 = vmatpush.msra.mxu0 %v717
        %753 = vmatpush.msra.mxu0 %v715
        %754 = vmatpush.msra.mxu0 %v713
        %755 = vmatmul.f32.gmra.mxu0 %v737
        %v756 = vpop.f32.mrf.mxu0
        %v757 = vadd.f32 %v734, %v756
        %758 = vdwg.mxu0
        %759 = vmatpush.msra.mxu0 0.0
        %760 = vmatpush.msra.mxu0 0.0
        %761 = vmatpush.msra.mxu0 0.0
        %762 = vmatpush.msra.mxu0 0.0
        %763 = vmatpush.msra.mxu0 0.0
        %764 = vmatpush.msra.mxu0 0.0
        %765 = vmatpush.msra.mxu0 0.0
        %766 = vmatpush.msra.mxu0 %v730
        %767 = vmatpush.msra.mxu0 %v728
        %768 = vmatpush.msra.mxu0 %v726
        %769 = vmatpush.msra.mxu0 %v724
        %770 = vmatpush.msra.mxu0 %v722
        %771 = vmatpush.msra.mxu0 %v720
        %772 = vmatpush.msra.mxu0 %v718
        %773 = vmatpush.msra.mxu0 %v716
        %774 = vmatpush.msra.mxu0 %v714
        %775 = vmatmul.f32.gmra.mxu0 %v737
        %v776 = vpop.f32.mrf.mxu0
        %v777 = vadd.f32 %v734, %v776
        %778 = vdwg.mxu0
        %v779 = vadd.f32 %v757, %v262
        %v780 = vadd.f32 %v777, %v263
        %v781 = vmax.f32 %v779, 0.0
        %v782 = vmax.f32 %v780, 0.0
        %783 = vst [vmem:[%s230] sm:$0xff] %v781
        %784 = vst [vmem:[%s230 + $0x8] sm:$0xff] %v782
        %s785 = sand.u32 %s119, 1
        %s786 = scalar_lea.sflag [#allocation6], %s785
        %s787 = sand.u32 %s119, 1
        %s788 = smul.addr %s787, 16
        %s789 = scalar_lea.vmem [#allocation9], %s788
        // Predicated region
        $region45: #{tpu_custom_call.1} parent=35 // pred_check
          %p790 = pneg %p129
        $region46: #{tpu_custom_call.1} parent=35 // pred_check_branch
          %792 = sbr.rel (%p790) target = $region48
        $region47: #{tpu_custom_call.1} parent=35 // pred_region
          %794 = vsyncadd %s786, 0
          %s795 = smul.addr %s22, 2
          %s796 = smul.addr %s795, 8
          %s797 = scalar_lea.hbm %s4, %s796
          %s799 = sshll.u32 %s789, 4
          %s800 = int_to_ptr.vmem [resolvable:$true] %s799
          %s801 = sshll.u32 %s797, 4
          %s802 = int_to_ptr.hbm [resolvable:$true] %s801
          %804 = dma.vmem_to_hbm [thread:$0]  %s800, 256, %s802, %s786
        $region48: #{tpu_custom_call.1} parent=35 // pred_fallthru
          _
      $region36: #{tpu_custom_call.1} parent=5 // pred_fallthru
        _
      %p805 = scmp.le.s32.totalorder 2, %s17
      // Predicated region
      $region49: #{tpu_custom_call.1} parent=5 // pred_check
        %p806 = pneg %p805
      $region50: #{tpu_custom_call.1} parent=5 // pred_check_branch
        %808 = sbr.rel (%p806) target = $region52
      $region51: #{tpu_custom_call.1} parent=5 // pred_region
        %s809 = ssub.s32 %s17, 2
        // Predicated region
        $region53: #{tpu_custom_call.1} parent=51 // pred_check
          %p810 = pneg %p135
        $region54: #{tpu_custom_call.1} parent=51 // pred_check_branch
          %812 = sbr.rel (%p810) target = $region56
        $region55: #{tpu_custom_call.1} parent=51 // pred_region
          %s813 = sand.u32 %s120, 1
          %s814 = scalar_lea.sflag [#allocation6], %s813
          %s815 = sand.u32 %s120, 1
          %s816 = smul.addr %s815, 16
          %s817 = scalar_lea.vmem [#allocation9], %s816
          %819 = dma.done %s814, 256
        $region56: #{tpu_custom_call.1} parent=51 // pred_fallthru
          _
      $region52: #{tpu_custom_call.1} parent=5 // pred_fallthru
        _
    $region6: #{tpu_custom_call.1} parent=1 // loop_footer
      %s21 = sadd.s32 1, %s17
    $region7: #{tpu_custom_call.1} parent=1 // loop_footer_branch
      %16 = sbr.rel target = $region3
    $region8: #{tpu_custom_call.1} parent=1 // loop_exit
      _
    %820 = vsyncpa [#allocation5], 1
    %s821 = scalar_lea.sflag [#allocation5], 1
    %822 = vsyncpa %s821, 1
    %823 = vsyncpa [#allocation8], 1
    %824 = vsyncpa [#allocation6], 1
    %s825 = scalar_lea.sflag [#allocation6], 1
    %826 = vsyncpa %s825, 1

</llo_original>
